<compile_context>
chip_gen: v7x
topology: tpu7x:2x2x1
jax: 0.10.0
libtpu: 0.0.40
codegen_flags: <defaults>
</compile_context>

<pallas_src>
import functools

import jax
import jax.numpy as jnp
import numpy as np
from jax.experimental import pallas as pl
from jax.experimental.pallas import tpu as pltpu

# ----------------------------- "opt" hyperparameters -----------------------------
QUEUE_SIZE = 256
MOMENTUM = 0.999
TEMPERATURE = 0.05
LABEL_SMOOTHING = 0.1
ALPHA = 0.8           # hard-coded in forward()
MARGIN = 2.0          # hard-coded in forward()
NORM_QUERY = True
NORM_DOC = True

# ----------------------------- synthetic retriever dims --------------------------
VOCAB = 64
HIDDEN = 128
PROJ = 128            # opt.projection_size
BSZ = 8
SEQ = 16


# =================================================================================
# Single fused kernel: encode(q, wq with enc_q; p with enc_k) + MoCo losses/stats
# + in-kernel queue enqueue.
#   stats layout: [p_loss, wp_loss, rank_loss, total_loss, accuracy, stdq, stdp, stdwq]
# =================================================================================
def _fused_moco_kernel(tok_ref, mask_ref, emb_q_ref, emb_k_ref,
                       w_q_ref, b_q_ref, w_k_ref, b_k_ref,
                       queue_ref, ptr_ref,
                       stats_ref, queue_out_ref, *,
                       B, S, vocab,
                       temperature, label_smoothing, alpha, margin,
                       norm_query, norm_doc, enqueue):
    f32 = jnp.float32
    R = 3 * B                                   # rows: [q | wq | p]

    # ---------------- synthetic encoder (one-hot MXU lookup + masked mean pool) -----
    tok = tok_ref[...]                          # (R*S, 1) int32
    mask = mask_ref[...]                        # (R*S, 1) float32
    row = jax.lax.broadcasted_iota(jnp.int32, (R * S, 1), 0)
    # p rows (last B*S) index into the enc_k half of the stacked embedding table
    tok = tok + jnp.where(row >= 2 * B * S, vocab, 0)

    vid = jax.lax.broadcasted_iota(jnp.int32, (R * S, 2 * vocab), 1)
    onehot = (vid == tok).astype(f32) * mask                      # mask folded in (lane bcast)
    counts = jnp.sum(onehot.reshape(R, S, 2 * vocab), axis=1)     # (R, 2V) weighted token hist
    emb_table = jnp.concatenate([emb_q_ref[...], emb_k_ref[...]], axis=0)   # (2V, H)
    summed = jnp.dot(counts, emb_table, preferred_element_type=f32)         # (R, H)
    denom = jnp.maximum(jnp.sum(counts, axis=-1, keepdims=True), 1e-9)      # == sum(mask)
    pooled = summed / denom                                                  # (R, H)

    pooled_qw = pooled[:2 * B]                  # rows encoded by encoder_q
    pooled_p = pooled[2 * B:]                   # rows encoded by encoder_k
    proj_qw = jnp.dot(pooled_qw, w_q_ref[...], preferred_element_type=f32) + b_q_ref[...]
    proj_p = jnp.dot(pooled_p, w_k_ref[...], preferred_element_type=f32) + b_k_ref[...]

    def l2norm(x):
        nrm = jnp.sqrt(jnp.sum(x * x, axis=-1, keepdims=True))
        return x / jnp.maximum(nrm, 1e-12)      # matches F.normalize(eps=1e-12)

    if norm_query:
        proj_qw = l2norm(proj_qw)
    if norm_doc:
        proj_p = l2norm(proj_p)

    q = proj_qw[:B]
    wq = proj_qw[B:]
    p = proj_p                                  # (B, P)
    queue = queue_ref[...]                      # (P, K)
    K = queue.shape[1]
    C = K + 1
    inv_t = 1.0 / temperature

    # ---------------- MoCo logits (single (2B,P)x(P,K) MXU matmul, LHS pre-scaled) ---
    pos_q = jnp.sum(q * p, axis=-1, keepdims=True)       # (B,1) UNSCALED (for rank loss)
    pos_wq = jnp.sum(wq * p, axis=-1, keepdims=True)
    neg_t = jnp.dot(proj_qw * inv_t, queue, preferred_element_type=f32)     # (2B, K) scaled
    p_neg_t = neg_t[:B]
    wp_neg_t = neg_t[B:]

    # cross_entropy(logits / T, labels=0, label_smoothing) without materializing (B, K+1)
    def smoothed_ce(pos_t, neg_tt):
        max_neg = jnp.max(neg_tt, axis=-1, keepdims=True)
        m = jnp.maximum(pos_t, max_neg)
        sum_exp = jnp.exp(pos_t - m) + jnp.sum(jnp.exp(neg_tt - m), axis=-1, keepdims=True)
        lse = jnp.log(sum_exp) + m
        logp_pos = pos_t - lse
        sum_logp = (pos_t - lse) + jnp.sum(neg_tt - lse, axis=-1, keepdims=True)
        loss = jnp.mean(-((1.0 - label_smoothing) * logp_pos + (label_smoothing / C) * sum_logp))
        correct = pos_t >= max_neg              # argmax(logits) == 0
        return loss, correct

    p_loss, correct_p = smoothed_ce(pos_q * inv_t, p_neg_t)
    wp_loss, correct_wp = smoothed_ce(pos_wq * inv_t, wp_neg_t)

    inter = jnp.logical_and(correct_p, correct_wp).astype(f32)   # (B,1)
    n_inter = jnp.sum(inter)

    # margin_ranking_loss on the UNSCALED positive logits (matches the torch code path)
    elem = jnp.maximum(margin - (pos_q - pos_wq), 0.0)
    rank_all = jnp.mean(elem)
    rank_sel = jnp.sum(elem * inter) / jnp.maximum(n_inter, 1.0)
    rank_loss = jnp.where(n_inter > 0, rank_sel, rank_all)

    total_loss = alpha * p_loss + (1.0 - alpha) * wp_loss + rank_loss

    # accuracy on the fused logits (uniform 1/T scale does not change the argmax)
    comb_pos = (alpha * pos_q + (1.0 - alpha) * pos_wq) * inv_t
    comb_neg = alpha * p_neg_t + (1.0 - alpha) * wp_neg_t
    correct = (comb_pos >= jnp.max(comb_neg, axis=-1, keepdims=True)).astype(f32)
    accuracy = 100.0 * jnp.mean(correct)

    # torch.std(x, dim=0).mean()  (unbiased, ddof=1)
    def feat_std(x):
        mu = jnp.mean(x, axis=0, keepdims=True)
        var = jnp.sum((x - mu) ** 2, axis=0, keepdims=True) / (B - 1)
        return jnp.mean(jnp.sqrt(var))

    stats_ref[0, 0] = p_loss
    stats_ref[0, 1] = wp_loss
    stats_ref[0, 2] = rank_loss
    stats_ref[0, 3] = total_loss
    stats_ref[0, 4] = accuracy
    stats_ref[0, 5] = feat_std(q)
    stats_ref[0, 6] = feat_std(p)
    stats_ref[0, 7] = feat_std(wq)

    # ---------------- in-kernel queue enqueue: columns [ptr, ptr+B) <- p.T ----------
    if enqueue:
        ptr = ptr_ref[0]
        col = jax.lax.broadcasted_iota(jnp.int32, (B, K), 1)
        rowb = jax.lax.broadcasted_iota(jnp.int32, (B, K), 0)
        scatter = (col == ptr + rowb).astype(f32)                 # (B, K) one-hot per row
        keep = 1.0 - jnp.max(scatter, axis=0, keepdims=True)      # (1, K)
        new_cols = jax.lax.dot_general(                           # p^T @ scatter -> (P, K)
            p, scatter, (((0,), (0,)), ((), ())), preferred_element_type=f32)
        queue_out_ref[...] = queue * keep + new_cols
    else:
        queue_out_ref[...] = queue


def _pallas_forward(tok_flat, mask_flat, emb_q, emb_k, w_q, b_q, w_k, b_k,
                    p_queue, ptr, *, B, S, vocab, norm_query, norm_doc, enqueue):
    R = 3 * B
    P, K = p_queue.shape
    H = emb_q.shape[1]
    kernel = functools.partial(
        _fused_moco_kernel, B=B, S=S, vocab=vocab,
        temperature=TEMPERATURE, label_smoothing=LABEL_SMOOTHING,
        alpha=ALPHA, margin=MARGIN,
        norm_query=norm_query, norm_doc=norm_doc, enqueue=enqueue)
    # TODO(synk): at realistic MoCo queue sizes (e.g. 65536) the (P, K) queue should be tiled
    # over a grid axis with an online-softmax accumulator; at K=256 a single block is fine.
    return pl.pallas_call(
        kernel,
        out_shape=(jax.ShapeDtypeStruct((1, 8), jnp.float32),
                   jax.ShapeDtypeStruct((P, K), jnp.float32)),
        grid=(1,),
        in_specs=[
            pl.BlockSpec((R * S, 1), lambda i: (0, 0)),            # tokens (flat)
            pl.BlockSpec((R * S, 1), lambda i: (0, 0)),            # mask (flat, lane-bcast)
            pl.BlockSpec((vocab, H), lambda i: (0, 0)),            # emb_q
            pl.BlockSpec((vocab, H), lambda i: (0, 0)),            # emb_k
            pl.BlockSpec((H, P), lambda i: (0, 0)),                # w_q
            pl.BlockSpec((1, P), lambda i: (0, 0)),                # b_q
            pl.BlockSpec((H, P), lambda i: (0, 0)),                # w_k
            pl.BlockSpec((1, P), lambda i: (0, 0)),                # b_k
            pl.BlockSpec((P, K), lambda i: (0, 0)),                # p_queue
            pl.BlockSpec(memory_space=pltpu.MemorySpace.SMEM),     # ptr scalar
        ],
        out_specs=(
            pl.BlockSpec((1, 8), lambda i: (0, 0),
                         memory_space=pltpu.MemorySpace.SMEM),     # stats
            pl.BlockSpec((P, K), lambda i: (0, 0)),                # updated queue
        ),
        input_output_aliases={8: 1},                               # queue in -> queue out
    )(tok_flat, mask_flat, emb_q, emb_k, w_q, b_q, w_k, b_k, p_queue, ptr)


# =================================================================================
# Device step: momentum update + stacking glue + the single fused kernel (all jitted)
# =================================================================================
@functools.partial(jax.jit, static_argnames=("train",))
def _device_step(enc_q, enc_k, p_queue, p_queue_ptr,
                 q_tokens, q_mask, wp_tokens, wp_mask, p_tokens, p_mask, *, train):
    if train:
        enc_k = jax.tree_util.tree_map(
            lambda pk, pq: pk * MOMENTUM + pq * (1.0 - MOMENTUM), enc_k, enc_q)
    B, S = q_tokens.shape
    tokens = jnp.concatenate([q_tokens, wp_tokens, p_tokens], axis=0).astype(jnp.int32)
    masks = jnp.concatenate([q_mask, wp_mask, p_mask], axis=0).astype(jnp.float32)
    tok_flat = tokens.reshape(3 * B * S, 1)
    mask_flat = masks.reshape(3 * B * S, 1)

    stats, new_queue = _pallas_forward(
        tok_flat, mask_flat, enc_q["emb"], enc_k["emb"],
        enc_q["w"], enc_q["b"], enc_k["w"], enc_k["b"],
        p_queue, p_queue_ptr.astype(jnp.int32),
        B=B, S=S, vocab=enc_q["emb"].shape[0],
        norm_query=NORM_QUERY, norm_doc=NORM_DOC, enqueue=train)

    new_ptr = (p_queue_ptr + B) % p_queue.shape[1] if train else p_queue_ptr
    return stats, new_queue, new_ptr, enc_k


def time_moco_q_forward(state, q_tokens, q_mask, k_tokens, k_mask, *,
                        wp_tokens, wp_mask, p_tokens, p_mask,
                        stats_prefix="", iter_stats=None):
    # k_tokens / k_mask are accepted for signature parity but, as in the PyTorch forward(),
    # never used: the key encoder consumes p_tokens / p_mask.
    if iter_stats is None:
        iter_stats = {}
    bsz = q_tokens.shape[0]
    assert state["p_queue"].shape[1] % bsz == 0

    train = stats_prefix == "train"
    stats, new_queue, new_ptr, new_enc_k = _device_step(
        state["encoder_q"], state["encoder_k"], state["p_queue"], state["p_queue_ptr"],
        q_tokens, q_mask, wp_tokens, wp_mask, p_tokens, p_mask, train=train)

    state = dict(state, p_queue=new_queue, p_queue_ptr=new_ptr)
    if train:
        state = dict(state, encoder_k=new_enc_k)

    loss = stats[0, 3]
    # one host transfer for all 8 stats (instead of 8 per-scalar device->host syncs)
    stats_np = np.asarray(jax.device_get(stats))[0]
    prefix = stats_prefix + "/" if len(stats_prefix) > 0 else ""
    names = ["p_loss", "wp_loss", "rank_loss", "all_loss", "accuracy", "stdq", "stdp", "stdwq"]
    for i, n in enumerate(names):
        iter_stats[f"{prefix}{n}"] = (float(stats_np[i]), bsz)
    return loss, iter_stats, state


# =================================================================================
# Pure-JAX reference (for correctness check)
# =================================================================================
def ref_encode(enc, tokens, mask, normalize):
    emb = enc["emb"][tokens]
    m = mask.astype(jnp.float32)
    pooled = (emb * m[:, :, None]).sum(1) / jnp.maximum(m.sum(1, keepdims=True), 1e-9)
    proj = pooled @ enc["w"] + enc["b"]
    if normalize:
        proj = proj / jnp.maximum(jnp.linalg.norm(proj, axis=-1, keepdims=True), 1e-12)
    return proj


def momentum_update(enc_q, enc_k, m):
    return jax.tree_util.tree_map(lambda pk, pq: pk * m + pq * (1.0 - m), enc_k, enc_q)


def ref_forward(state, q_tokens, q_mask, wp_tokens, wp_mask, p_tokens, p_mask):
    enc_q = state["encoder_q"]
    enc_k = momentum_update(enc_q, state["encoder_k"], MOMENTUM)
    q = ref_encode(enc_q, q_tokens, q_mask, NORM_QUERY)
    wq = ref_encode(enc_q, wp_tokens, wp_mask, NORM_QUERY)
    p = ref_encode(enc_k, p_tokens, p_mask, NORM_DOC)
    queue = state["p_queue"]

    def logits_of(x):
        l_pos = jnp.sum(x * p, -1, keepdims=True)
        l_neg = x @ queue
        return l_pos, jnp.concatenate([l_pos, l_neg], axis=1)

    p_pos, p_logits = logits_of(q)
    wp_pos, wp_logits = logits_of(wq)
    p_logits = p_logits / TEMPERATURE
    wp_logits = wp_logits / TEMPERATURE

    def ce(logits):
        logp = jax.nn.log_softmax(logits, -1)
        C = logits.shape[1]
        li = -((1 - LABEL_SMOOTHING) * logp[:, 0] + (LABEL_SMOOTHING / C) * logp.sum(-1))
        return li.mean()

    p_loss, wp_loss = ce(p_logits), ce(wp_logits)
    correct_p = jnp.argmax(p_logits, -1) == 0
    correct_wp = jnp.argmax(wp_logits, -1) == 0
    inter = (correct_p & correct_wp).astype(jnp.float32)
    elem = jnp.maximum(MARGIN - (p_pos - wp_pos)[:, 0], 0.0)
    rank = jnp.where(inter.sum() > 0, (elem * inter).sum() / jnp.maximum(inter.sum(), 1.0),
                     elem.mean())
    loss = ALPHA * p_loss + (1 - ALPHA) * wp_loss + rank
    comb = ALPHA * p_logits + (1 - ALPHA) * wp_logits
    acc = 100.0 * (jnp.argmax(comb, -1) == 0).mean()
    std = lambda x: jnp.std(x, axis=0, ddof=1).mean()
    stats = jnp.array([p_loss, wp_loss, rank, loss, acc, std(q), std(p), std(wq)])
    new_queue = jax.lax.dynamic_update_slice(queue, p.T, (0, state["p_queue_ptr"][0]))
    return stats, new_queue


# =================================================================================
if __name__ == "__main__":
    key = jax.random.PRNGKey(0)
    ks = jax.random.split(key, 12)

    # encoder_q params (encoder_k is a deep copy of encoder_q, as in __init__)
    # TODO(synk): the HuggingFace Contriever encoder is replaced by this synthetic
    # embedding -> masked-mean-pool -> linear encoder; dist_utils.gather_nograd is omitted
    # (single device).
    enc_q = {
        "emb": jax.random.normal(ks[0], (VOCAB, HIDDEN), jnp.float32) * 0.05,
        "w": jax.random.normal(ks[1], (HIDDEN, PROJ), jnp.float32) / np.sqrt(HIDDEN),
        "b": jax.random.normal(ks[2], (1, PROJ), jnp.float32) * 0.01,
    }
    enc_k = jax.tree_util.tree_map(lambda x: x.copy(), enc_q)

    p_queue = jax.random.normal(ks[3], (PROJ, QUEUE_SIZE), jnp.float32)
    p_queue = p_queue / jnp.linalg.norm(p_queue, axis=0, keepdims=True)
    wp_queue = jax.random.normal(ks[4], (PROJ, QUEUE_SIZE), jnp.float32)
    wp_queue = wp_queue / jnp.linalg.norm(wp_queue, axis=0, keepdims=True)

    # wp_queue / wp_queue_ptr are registered buffers in the PyTorch module but are never
    # read or updated inside forward(); they are carried here untouched.
    state = dict(encoder_q=enc_q, encoder_k=enc_k,
                 p_queue=p_queue, p_queue_ptr=jnp.zeros((1,), jnp.int32),
                 wp_queue=wp_queue, wp_queue_ptr=jnp.zeros((1,), jnp.int32))

    def make_tokens(k1, k2):
        toks = jax.random.randint(k1, (BSZ, SEQ), 0, VOCAB, dtype=jnp.int32)
        mask = (jax.random.uniform(k2, (BSZ, SEQ)) > 0.2).astype(jnp.int32)
        mask = mask.at[:, 0].set(1)
        return toks, mask

    q_tokens, q_mask = make_tokens(ks[5], ks[6])
    p_tokens, p_mask = make_tokens(ks[7], ks[8])
    wp_tokens, wp_mask = make_tokens(ks[9], ks[10])
    k_tokens, k_mask = p_tokens, p_mask   # forward() ignores k_tokens/k_mask

    # pure-JAX reference (computed first, against the original buffers)
    ref_stats, ref_queue = ref_forward(state, q_tokens, q_mask, wp_tokens, wp_mask,
                                       p_tokens, p_mask)
    ref_stats = np.asarray(ref_stats)
    ref_queue = np.asarray(ref_queue)

    loss, iter_stats, new_state = time_moco_q_forward(
        state, q_tokens, q_mask, k_tokens, k_mask,
        wp_tokens=wp_tokens, wp_mask=wp_mask,
        p_tokens=p_tokens, p_mask=p_mask,
        stats_prefix="train")
    jax.block_until_ready(loss)
    jax.block_until_ready(new_state["p_queue"])

    got_stats = np.array([iter_stats[f"train/{n}"][0] for n in
                          ["p_loss", "wp_loss", "rank_loss", "all_loss",
                           "accuracy", "stdq", "stdp", "stdwq"]], dtype=np.float32)
    np.testing.assert_allclose(got_stats, ref_stats, rtol=2e-4, atol=2e-4)
    np.testing.assert_allclose(np.asarray(new_state["p_queue"]), ref_queue,
                               rtol=1e-5, atol=1e-5)
    assert int(new_state["p_queue_ptr"][0]) == BSZ

    print("KERNEL_OK")
</pallas_src>

<mosaic_0001>
module attributes {stable_mosaic.version = 11 : i64} {
  func.func @_fused_moco_kernel(%arg0: i32, %arg1: memref<384x1xi32, #tpu.memory_space<vmem>>, %arg2: memref<384x1xf32, #tpu.memory_space<vmem>>, %arg3: memref<64x128xf32, #tpu.memory_space<vmem>>, %arg4: memref<64x128xf32, #tpu.memory_space<vmem>>, %arg5: memref<128x128xf32, #tpu.memory_space<vmem>>, %arg6: memref<1x128xf32, #tpu.memory_space<vmem>>, %arg7: memref<128x128xf32, #tpu.memory_space<vmem>>, %arg8: memref<1x128xf32, #tpu.memory_space<vmem>>, %arg9: memref<128x256xf32, #tpu.memory_space<vmem>>, %arg10: memref<1xi32, #tpu.memory_space<smem>>, %arg11: memref<1x8xf32, #tpu.memory_space<smem>>, %arg12: memref<128x256xf32, #tpu.memory_space<vmem>>) attributes {dimension_semantics = [#tpu.dimension_semantics<arbitrary>], iteration_bounds = array<i64: 1>, scalar_prefetch = 0 : i64, scratch_operands = 0 : i64, tpu.core_type = #tpu.core_type<tc>, window_params = [{pipeline_mode = #tpu.pipeline_mode<synchronous>, transform_indices = @transform_0, window_bounds = array<i64: 384, 1>}, {pipeline_mode = #tpu.pipeline_mode<synchronous>, transform_indices = @transform_1, window_bounds = array<i64: 384, 1>}, {pipeline_mode = #tpu.pipeline_mode<synchronous>, transform_indices = @transform_2, window_bounds = array<i64: 64, 128>}, {pipeline_mode = #tpu.pipeline_mode<synchronous>, transform_indices = @transform_3, window_bounds = array<i64: 64, 128>}, {pipeline_mode = #tpu.pipeline_mode<synchronous>, transform_indices = @transform_4, window_bounds = array<i64: 128, 128>}, {pipeline_mode = #tpu.pipeline_mode<synchronous>, transform_indices = @transform_5, window_bounds = array<i64: 1, 128>}, {pipeline_mode = #tpu.pipeline_mode<synchronous>, transform_indices = @transform_6, window_bounds = array<i64: 128, 128>}, {pipeline_mode = #tpu.pipeline_mode<synchronous>, transform_indices = @transform_7, window_bounds = array<i64: 1, 128>}, {pipeline_mode = #tpu.pipeline_mode<synchronous>, transform_indices = @transform_8, window_bounds = array<i64: 128, 256>}, {transform_indices = @transform_9, window_bounds = array<i64: 1>}, {transform_indices = @transform_10, window_bounds = array<i64: 1, 8>}, {pipeline_mode = #tpu.pipeline_mode<synchronous>, transform_indices = @transform_11, window_bounds = array<i64: 128, 256>}]} {
    %c0 = arith.constant 0 : index
    %c0_0 = arith.constant 0 : index
    %0 = vector.load %arg1[%c0, %c0_0] : memref<384x1xi32, #tpu.memory_space<vmem>>, vector<384x1xi32>
    %c0_1 = arith.constant 0 : index
    %c0_2 = arith.constant 0 : index
    %1 = vector.load %arg2[%c0_1, %c0_2] : memref<384x1xf32, #tpu.memory_space<vmem>>, vector<384x1xf32>
    %2 = tpu.iota {dimensions = array<i32: 0>} : vector<384x1xi32>
    %c256_i32 = arith.constant 256 : i32
    %3 = vector.broadcast %c256_i32 : i32 to vector<384x1xi32>
    %4 = arith.cmpi sge, %2, %3 : vector<384x1xi32>
    %c64_i32 = arith.constant 64 : i32
    %c0_i32 = arith.constant 0 : i32
    %5 = vector.broadcast %c64_i32 : i32 to vector<384x1xi32>
    %6 = vector.broadcast %c0_i32 : i32 to vector<384x1xi32>
    %7 = arith.select %4, %5, %6 : vector<384x1xi1>, vector<384x1xi32>
    %8 = arith.addi %0, %7 : vector<384x1xi32>
    %9 = tpu.iota {dimensions = array<i32: 1>} : vector<384x128xi32>
    %10 = vector.broadcast %8 : vector<384x1xi32> to vector<384x128xi32>
    %11 = arith.cmpi eq, %9, %10 : vector<384x128xi32>
    %12 = arith.extui %11 : vector<384x128xi1> to vector<384x128xi32>
    %13 = arith.sitofp %12 : vector<384x128xi32> to vector<384x128xf32>
    %14 = vector.broadcast %1 : vector<384x1xf32> to vector<384x128xf32>
    %15 = arith.mulf %13, %14 : vector<384x128xf32>
    %16 = vector.shape_cast %15 : vector<384x128xf32> to vector<24x16x128xf32>
    %cst = arith.constant dense<0.000000e+00> : vector<24x128xf32>
    %17 = vector.multi_reduction <add>, %16, %cst [1] : vector<24x16x128xf32> to vector<24x128xf32>
    %c0_3 = arith.constant 0 : index
    %c0_4 = arith.constant 0 : index
    %18 = vector.load %arg3[%c0_3, %c0_4] : memref<64x128xf32, #tpu.memory_space<vmem>>, vector<64x128xf32>
    %c0_5 = arith.constant 0 : index
    %c0_6 = arith.constant 0 : index
    %19 = vector.load %arg4[%c0_5, %c0_6] : memref<64x128xf32, #tpu.memory_space<vmem>>, vector<64x128xf32>
    %20 = tpu.concatenate %18, %19 in 0 : vector<64x128xf32>, vector<64x128xf32> -> vector<128x128xf32>
    %cst_7 = arith.constant dense<0.000000e+00> : vector<24x128xf32>
    %21 = tpu.matmul %17, %20, %cst_7 {dimension_numbers = #tpu.dot_dimension_numbers<[1], [0], [0], [1], [0, 0, 1, 1], [], []>} : vector<24x128xf32>, vector<128x128xf32>, vector<24x128xf32> -> vector<24x128xf32>
    %cst_8 = arith.constant dense<0.000000e+00> : vector<24xf32>
    %22 = vector.multi_reduction <add>, %17, %cst_8 [1] : vector<24x128xf32> to vector<24xf32>
    %23 = vector.shape_cast %22 : vector<24xf32> to vector<24x1xf32>
    %cst_9 = arith.constant 9.99999971E-10 : f32
    %24 = vector.broadcast %cst_9 : f32 to vector<24x1xf32>
    %25 = arith.maximumf %23, %24 : vector<24x1xf32>
    %26 = vector.broadcast %25 : vector<24x1xf32> to vector<24x128xf32>
    %27 = arith.divf %21, %26 : vector<24x128xf32>
    %28 = vector.extract_strided_slice %27 {offsets = [0, 0], sizes = [16, 128], strides = [1, 1]} : vector<24x128xf32> to vector<16x128xf32>
    %29 = vector.extract_strided_slice %27 {offsets = [16, 0], sizes = [8, 128], strides = [1, 1]} : vector<24x128xf32> to vector<8x128xf32>
    %c0_10 = arith.constant 0 : index
    %c0_11 = arith.constant 0 : index
    %30 = vector.load %arg5[%c0_10, %c0_11] : memref<128x128xf32, #tpu.memory_space<vmem>>, vector<128x128xf32>
    %cst_12 = arith.constant dense<0.000000e+00> : vector<16x128xf32>
    %31 = tpu.matmul %28, %30, %cst_12 {dimension_numbers = #tpu.dot_dimension_numbers<[1], [0], [0], [1], [0, 0, 1, 1], [], []>} : vector<16x128xf32>, vector<128x128xf32>, vector<16x128xf32> -> vector<16x128xf32>
    %c0_13 = arith.constant 0 : index
    %c0_14 = arith.constant 0 : index
    %32 = vector.load %arg6[%c0_13, %c0_14] : memref<1x128xf32, #tpu.memory_space<vmem>>, vector<1x128xf32>
    %33 = vector.broadcast %32 : vector<1x128xf32> to vector<16x128xf32>
    %34 = arith.addf %31, %33 : vector<16x128xf32>
    %c0_15 = arith.constant 0 : index
    %c0_16 = arith.constant 0 : index
    %35 = vector.load %arg7[%c0_15, %c0_16] : memref<128x128xf32, #tpu.memory_space<vmem>>, vector<128x128xf32>
    %cst_17 = arith.constant dense<0.000000e+00> : vector<8x128xf32>
    %36 = tpu.matmul %29, %35, %cst_17 {dimension_numbers = #tpu.dot_dimension_numbers<[1], [0], [0], [1], [0, 0, 1, 1], [], []>} : vector<8x128xf32>, vector<128x128xf32>, vector<8x128xf32> -> vector<8x128xf32>
    %c0_18 = arith.constant 0 : index
    %c0_19 = arith.constant 0 : index
    %37 = vector.load %arg8[%c0_18, %c0_19] : memref<1x128xf32, #tpu.memory_space<vmem>>, vector<1x128xf32>
    %38 = vector.broadcast %37 : vector<1x128xf32> to vector<8x128xf32>
    %39 = arith.addf %36, %38 : vector<8x128xf32>
    %40 = arith.mulf %34, %34 : vector<16x128xf32>
    %cst_20 = arith.constant dense<0.000000e+00> : vector<16xf32>
    %41 = vector.multi_reduction <add>, %40, %cst_20 [1] : vector<16x128xf32> to vector<16xf32>
    %42 = vector.shape_cast %41 : vector<16xf32> to vector<16x1xf32>
    %43 = math.sqrt %42 : vector<16x1xf32>
    %cst_21 = arith.constant 9.99999996E-13 : f32
    %44 = vector.broadcast %cst_21 : f32 to vector<16x1xf32>
    %45 = arith.maximumf %43, %44 : vector<16x1xf32>
    %46 = vector.broadcast %45 : vector<16x1xf32> to vector<16x128xf32>
    %47 = arith.divf %34, %46 : vector<16x128xf32>
    %48 = arith.mulf %39, %39 : vector<8x128xf32>
    %cst_22 = arith.constant dense<0.000000e+00> : vector<8xf32>
    %49 = vector.multi_reduction <add>, %48, %cst_22 [1] : vector<8x128xf32> to vector<8xf32>
    %50 = vector.shape_cast %49 : vector<8xf32> to vector<8x1xf32>
    %51 = math.sqrt %50 : vector<8x1xf32>
    %cst_23 = arith.constant 9.99999996E-13 : f32
    %52 = vector.broadcast %cst_23 : f32 to vector<8x1xf32>
    %53 = arith.maximumf %51, %52 : vector<8x1xf32>
    %54 = vector.broadcast %53 : vector<8x1xf32> to vector<8x128xf32>
    %55 = arith.divf %39, %54 : vector<8x128xf32>
    %56 = vector.extract_strided_slice %47 {offsets = [0, 0], sizes = [8, 128], strides = [1, 1]} : vector<16x128xf32> to vector<8x128xf32>
    %57 = vector.extract_strided_slice %47 {offsets = [8, 0], sizes = [8, 128], strides = [1, 1]} : vector<16x128xf32> to vector<8x128xf32>
    %c0_24 = arith.constant 0 : index
    %c0_25 = arith.constant 0 : index
    %58 = vector.load %arg9[%c0_24, %c0_25] : memref<128x256xf32, #tpu.memory_space<vmem>>, vector<128x256xf32>
    %59 = arith.mulf %56, %55 : vector<8x128xf32>
    %cst_26 = arith.constant dense<0.000000e+00> : vector<8xf32>
    %60 = vector.multi_reduction <add>, %59, %cst_26 [1] : vector<8x128xf32> to vector<8xf32>
    %61 = vector.shape_cast %60 : vector<8xf32> to vector<8x1xf32>
    %62 = arith.mulf %57, %55 : vector<8x128xf32>
    %cst_27 = arith.constant dense<0.000000e+00> : vector<8xf32>
    %63 = vector.multi_reduction <add>, %62, %cst_27 [1] : vector<8x128xf32> to vector<8xf32>
    %64 = vector.shape_cast %63 : vector<8xf32> to vector<8x1xf32>
    %cst_28 = arith.constant 2.000000e+01 : f32
    %65 = vector.broadcast %cst_28 : f32 to vector<16x128xf32>
    %66 = arith.mulf %47, %65 : vector<16x128xf32>
    %cst_29 = arith.constant dense<0.000000e+00> : vector<16x256xf32>
    %67 = tpu.matmul %66, %58, %cst_29 {dimension_numbers = #tpu.dot_dimension_numbers<[1], [0], [0], [1], [0, 0, 1, 1], [], []>} : vector<16x128xf32>, vector<128x256xf32>, vector<16x256xf32> -> vector<16x256xf32>
    %68 = vector.extract_strided_slice %67 {offsets = [0, 0], sizes = [8, 256], strides = [1, 1]} : vector<16x256xf32> to vector<8x256xf32>
    %69 = vector.extract_strided_slice %67 {offsets = [8, 0], sizes = [8, 256], strides = [1, 1]} : vector<16x256xf32> to vector<8x256xf32>
    %cst_30 = arith.constant 2.000000e+01 : f32
    %70 = vector.broadcast %cst_30 : f32 to vector<8x1xf32>
    %71 = arith.mulf %61, %70 : vector<8x1xf32>
    %cst_31 = arith.constant dense<0xFF800000> : vector<8xf32>
    %72 = vector.multi_reduction <maximumf>, %68, %cst_31 [1] : vector<8x256xf32> to vector<8xf32>
    %73 = vector.shape_cast %72 : vector<8xf32> to vector<8x1xf32>
    %74 = arith.maximumf %71, %73 : vector<8x1xf32>
    %75 = arith.subf %71, %74 : vector<8x1xf32>
    %76 = math.exp %75 : vector<8x1xf32>
    %77 = vector.broadcast %74 : vector<8x1xf32> to vector<8x256xf32>
    %78 = arith.subf %68, %77 : vector<8x256xf32>
    %79 = math.exp %78 : vector<8x256xf32>
    %cst_32 = arith.constant dense<0.000000e+00> : vector<8xf32>
    %80 = vector.multi_reduction <add>, %79, %cst_32 [1] : vector<8x256xf32> to vector<8xf32>
    %81 = vector.shape_cast %80 : vector<8xf32> to vector<8x1xf32>
    %82 = arith.addf %76, %81 : vector<8x1xf32>
    %83 = math.log %82 : vector<8x1xf32>
    %84 = arith.addf %83, %74 : vector<8x1xf32>
    %85 = arith.subf %71, %84 : vector<8x1xf32>
    %86 = arith.subf %71, %84 : vector<8x1xf32>
    %87 = vector.broadcast %84 : vector<8x1xf32> to vector<8x256xf32>
    %88 = arith.subf %68, %87 : vector<8x256xf32>
    %cst_33 = arith.constant dense<0.000000e+00> : vector<8xf32>
    %89 = vector.multi_reduction <add>, %88, %cst_33 [1] : vector<8x256xf32> to vector<8xf32>
    %90 = vector.shape_cast %89 : vector<8xf32> to vector<8x1xf32>
    %91 = arith.addf %86, %90 : vector<8x1xf32>
    %cst_34 = arith.constant 0.899999976 : f32
    %92 = vector.broadcast %cst_34 : f32 to vector<8x1xf32>
    %93 = arith.mulf %92, %85 : vector<8x1xf32>
    %cst_35 = arith.constant 3.89105058E-4 : f32
    %94 = vector.broadcast %cst_35 : f32 to vector<8x1xf32>
    %95 = arith.mulf %94, %91 : vector<8x1xf32>
    %96 = arith.addf %93, %95 : vector<8x1xf32>
    %cst_36 = arith.constant 0.000000e+00 : f32
    %97 = vector.broadcast %cst_36 : f32 to vector<8x1xf32>
    %98 = arith.subf %97, %96 : vector<8x1xf32>
    %99 = vector.shape_cast %98 : vector<8x1xf32> to vector<1x8x1xf32>
    %cst_37 = arith.constant dense<0.000000e+00> : vector<1xf32>
    %100 = vector.multi_reduction <add>, %99, %cst_37 [1, 2] : vector<1x8x1xf32> to vector<1xf32>
    %101 = vector.shape_cast %100 : vector<1xf32> to vector<1x1x1xf32>
    %102 = vector.extract %101[0, 0, 0] : f32 from vector<1x1x1xf32>
    %cst_38 = arith.constant 8.000000e+00 : f32
    %103 = arith.divf %102, %cst_38 : f32
    %104 = arith.cmpf oge, %71, %73 : vector<8x1xf32>
    %cst_39 = arith.constant 2.000000e+01 : f32
    %105 = vector.broadcast %cst_39 : f32 to vector<8x1xf32>
    %106 = arith.mulf %64, %105 : vector<8x1xf32>
    %cst_40 = arith.constant dense<0xFF800000> : vector<8xf32>
    %107 = vector.multi_reduction <maximumf>, %69, %cst_40 [1] : vector<8x256xf32> to vector<8xf32>
    %108 = vector.shape_cast %107 : vector<8xf32> to vector<8x1xf32>
    %109 = arith.maximumf %106, %108 : vector<8x1xf32>
    %110 = arith.subf %106, %109 : vector<8x1xf32>
    %111 = math.exp %110 : vector<8x1xf32>
    %112 = vector.broadcast %109 : vector<8x1xf32> to vector<8x256xf32>
    %113 = arith.subf %69, %112 : vector<8x256xf32>
    %114 = math.exp %113 : vector<8x256xf32>
    %cst_41 = arith.constant dense<0.000000e+00> : vector<8xf32>
    %115 = vector.multi_reduction <add>, %114, %cst_41 [1] : vector<8x256xf32> to vector<8xf32>
    %116 = vector.shape_cast %115 : vector<8xf32> to vector<8x1xf32>
    %117 = arith.addf %111, %116 : vector<8x1xf32>
    %118 = math.log %117 : vector<8x1xf32>
    %119 = arith.addf %118, %109 : vector<8x1xf32>
    %120 = arith.subf %106, %119 : vector<8x1xf32>
    %121 = arith.subf %106, %119 : vector<8x1xf32>
    %122 = vector.broadcast %119 : vector<8x1xf32> to vector<8x256xf32>
    %123 = arith.subf %69, %122 : vector<8x256xf32>
    %cst_42 = arith.constant dense<0.000000e+00> : vector<8xf32>
    %124 = vector.multi_reduction <add>, %123, %cst_42 [1] : vector<8x256xf32> to vector<8xf32>
    %125 = vector.shape_cast %124 : vector<8xf32> to vector<8x1xf32>
    %126 = arith.addf %121, %125 : vector<8x1xf32>
    %cst_43 = arith.constant 0.899999976 : f32
    %127 = vector.broadcast %cst_43 : f32 to vector<8x1xf32>
    %128 = arith.mulf %127, %120 : vector<8x1xf32>
    %cst_44 = arith.constant 3.89105058E-4 : f32
    %129 = vector.broadcast %cst_44 : f32 to vector<8x1xf32>
    %130 = arith.mulf %129, %126 : vector<8x1xf32>
    %131 = arith.addf %128, %130 : vector<8x1xf32>
    %cst_45 = arith.constant 0.000000e+00 : f32
    %132 = vector.broadcast %cst_45 : f32 to vector<8x1xf32>
    %133 = arith.subf %132, %131 : vector<8x1xf32>
    %134 = vector.shape_cast %133 : vector<8x1xf32> to vector<1x8x1xf32>
    %cst_46 = arith.constant dense<0.000000e+00> : vector<1xf32>
    %135 = vector.multi_reduction <add>, %134, %cst_46 [1, 2] : vector<1x8x1xf32> to vector<1xf32>
    %136 = vector.shape_cast %135 : vector<1xf32> to vector<1x1x1xf32>
    %137 = vector.extract %136[0, 0, 0] : f32 from vector<1x1x1xf32>
    %cst_47 = arith.constant 8.000000e+00 : f32
    %138 = arith.divf %137, %cst_47 : f32
    %139 = arith.cmpf oge, %106, %108 : vector<8x1xf32>
    %140 = arith.andi %104, %139 : vector<8x1xi1>
    %141 = arith.extui %140 : vector<8x1xi1> to vector<8x1xi32>
    %142 = arith.sitofp %141 : vector<8x1xi32> to vector<8x1xf32>
    %143 = vector.shape_cast %142 : vector<8x1xf32> to vector<1x8x1xf32>
    %cst_48 = arith.constant dense<0.000000e+00> : vector<1xf32>
    %144 = vector.multi_reduction <add>, %143, %cst_48 [1, 2] : vector<1x8x1xf32> to vector<1xf32>
    %145 = vector.shape_cast %144 : vector<1xf32> to vector<1x1x1xf32>
    %146 = vector.extract %145[0, 0, 0] : f32 from vector<1x1x1xf32>
    %147 = arith.subf %61, %64 : vector<8x1xf32>
    %cst_49 = arith.constant 2.000000e+00 : f32
    %148 = vector.broadcast %cst_49 : f32 to vector<8x1xf32>
    %149 = arith.subf %148, %147 : vector<8x1xf32>
    %cst_50 = arith.constant 0.000000e+00 : f32
    %150 = vector.broadcast %cst_50 : f32 to vector<8x1xf32>
    %151 = arith.maximumf %149, %150 : vector<8x1xf32>
    %152 = vector.shape_cast %151 : vector<8x1xf32> to vector<1x8x1xf32>
    %cst_51 = arith.constant dense<0.000000e+00> : vector<1xf32>
    %153 = vector.multi_reduction <add>, %152, %cst_51 [1, 2] : vector<1x8x1xf32> to vector<1xf32>
    %154 = vector.shape_cast %153 : vector<1xf32> to vector<1x1x1xf32>
    %155 = vector.extract %154[0, 0, 0] : f32 from vector<1x1x1xf32>
    %cst_52 = arith.constant 8.000000e+00 : f32
    %156 = arith.divf %155, %cst_52 : f32
    %157 = arith.mulf %151, %142 : vector<8x1xf32>
    %158 = vector.shape_cast %157 : vector<8x1xf32> to vector<1x8x1xf32>
    %cst_53 = arith.constant dense<0.000000e+00> : vector<1xf32>
    %159 = vector.multi_reduction <add>, %158, %cst_53 [1, 2] : vector<1x8x1xf32> to vector<1xf32>
    %160 = vector.shape_cast %159 : vector<1xf32> to vector<1x1x1xf32>
    %161 = vector.extract %160[0, 0, 0] : f32 from vector<1x1x1xf32>
    %cst_54 = arith.constant 1.000000e+00 : f32
    %162 = arith.maximumf %146, %cst_54 : f32
    %163 = arith.divf %161, %162 : f32
    %cst_55 = arith.constant 0.000000e+00 : f32
    %164 = arith.cmpf ogt, %146, %cst_55 : f32
    %165 = arith.select %164, %163, %156 : f32
    %cst_56 = arith.constant 8.000000e-01 : f32
    %166 = arith.mulf %cst_56, %103 : f32
    %cst_57 = arith.constant 2.000000e-01 : f32
    %167 = arith.mulf %cst_57, %138 : f32
    %168 = arith.addf %166, %167 : f32
    %169 = arith.addf %168, %165 : f32
    %cst_58 = arith.constant 8.000000e-01 : f32
    %170 = vector.broadcast %cst_58 : f32 to vector<8x1xf32>
    %171 = arith.mulf %170, %61 : vector<8x1xf32>
    %cst_59 = arith.constant 2.000000e-01 : f32
    %172 = vector.broadcast %cst_59 : f32 to vector<8x1xf32>
    %173 = arith.mulf %172, %64 : vector<8x1xf32>
    %174 = arith.addf %171, %173 : vector<8x1xf32>
    %cst_60 = arith.constant 2.000000e+01 : f32
    %175 = vector.broadcast %cst_60 : f32 to vector<8x1xf32>
    %176 = arith.mulf %174, %175 : vector<8x1xf32>
    %cst_61 = arith.constant 8.000000e-01 : f32
    %177 = vector.broadcast %cst_61 : f32 to vector<8x256xf32>
    %178 = arith.mulf %177, %68 : vector<8x256xf32>
    %cst_62 = arith.constant 2.000000e-01 : f32
    %179 = vector.broadcast %cst_62 : f32 to vector<8x256xf32>
    %180 = arith.mulf %179, %69 : vector<8x256xf32>
    %181 = arith.addf %178, %180 : vector<8x256xf32>
    %cst_63 = arith.constant dense<0xFF800000> : vector<8xf32>
    %182 = vector.multi_reduction <maximumf>, %181, %cst_63 [1] : vector<8x256xf32> to vector<8xf32>
    %183 = vector.shape_cast %182 : vector<8xf32> to vector<8x1xf32>
    %184 = arith.cmpf oge, %176, %183 : vector<8x1xf32>
    %185 = arith.extui %184 : vector<8x1xi1> to vector<8x1xi32>
    %186 = arith.sitofp %185 : vector<8x1xi32> to vector<8x1xf32>
    %187 = vector.shape_cast %186 : vector<8x1xf32> to vector<1x8x1xf32>
    %cst_64 = arith.constant dense<0.000000e+00> : vector<1xf32>
    %188 = vector.multi_reduction <add>, %187, %cst_64 [1, 2] : vector<1x8x1xf32> to vector<1xf32>
    %189 = vector.shape_cast %188 : vector<1xf32> to vector<1x1x1xf32>
    %190 = vector.extract %189[0, 0, 0] : f32 from vector<1x1x1xf32>
    %cst_65 = arith.constant 8.000000e+00 : f32
    %191 = arith.divf %190, %cst_65 : f32
    %cst_66 = arith.constant 1.000000e+02 : f32
    %192 = arith.mulf %cst_66, %191 : f32
    %c0_67 = arith.constant 0 : index
    %c0_68 = arith.constant 0 : index
    %193 = memref.load %arg11[%c0_67, %c0_68] : memref<1x8xf32, #tpu.memory_space<smem>>
    memref.store %103, %arg11[%c0_67, %c0_68] : memref<1x8xf32, #tpu.memory_space<smem>>
    %c0_69 = arith.constant 0 : index
    %c1 = arith.constant 1 : index
    %194 = memref.load %arg11[%c0_69, %c1] : memref<1x8xf32, #tpu.memory_space<smem>>
    memref.store %138, %arg11[%c0_69, %c1] : memref<1x8xf32, #tpu.memory_space<smem>>
    %c0_70 = arith.constant 0 : index
    %c2 = arith.constant 2 : index
    %195 = memref.load %arg11[%c0_70, %c2] : memref<1x8xf32, #tpu.memory_space<smem>>
    memref.store %165, %arg11[%c0_70, %c2] : memref<1x8xf32, #tpu.memory_space<smem>>
    %c0_71 = arith.constant 0 : index
    %c3 = arith.constant 3 : index
    %196 = memref.load %arg11[%c0_71, %c3] : memref<1x8xf32, #tpu.memory_space<smem>>
    memref.store %169, %arg11[%c0_71, %c3] : memref<1x8xf32, #tpu.memory_space<smem>>
    %c0_72 = arith.constant 0 : index
    %c4 = arith.constant 4 : index
    %197 = memref.load %arg11[%c0_72, %c4] : memref<1x8xf32, #tpu.memory_space<smem>>
    memref.store %192, %arg11[%c0_72, %c4] : memref<1x8xf32, #tpu.memory_space<smem>>
    %cst_73 = arith.constant dense<0.000000e+00> : vector<128xf32>
    %198 = vector.multi_reduction <add>, %56, %cst_73 [0] : vector<8x128xf32> to vector<128xf32>
    %199 = vector.shape_cast %198 : vector<128xf32> to vector<1x128xf32>
    %cst_74 = arith.constant 8.000000e+00 : f32
    %200 = vector.broadcast %cst_74 : f32 to vector<1x128xf32>
    %201 = arith.divf %199, %200 : vector<1x128xf32>
    %202 = vector.broadcast %201 : vector<1x128xf32> to vector<8x128xf32>
    %203 = arith.subf %56, %202 : vector<8x128xf32>
    %204 = arith.mulf %203, %203 : vector<8x128xf32>
    %cst_75 = arith.constant dense<0.000000e+00> : vector<128xf32>
    %205 = vector.multi_reduction <add>, %204, %cst_75 [0] : vector<8x128xf32> to vector<128xf32>
    %206 = vector.shape_cast %205 : vector<128xf32> to vector<1x128xf32>
    %cst_76 = arith.constant 7.000000e+00 : f32
    %207 = vector.broadcast %cst_76 : f32 to vector<1x128xf32>
    %208 = arith.divf %206, %207 : vector<1x128xf32>
    %209 = math.sqrt %208 : vector<1x128xf32>
    %210 = vector.shape_cast %209 : vector<1x128xf32> to vector<1x1x128xf32>
    %cst_77 = arith.constant dense<0.000000e+00> : vector<1xf32>
    %211 = vector.multi_reduction <add>, %210, %cst_77 [1, 2] : vector<1x1x128xf32> to vector<1xf32>
    %212 = vector.shape_cast %211 : vector<1xf32> to vector<1x1x1xf32>
    %213 = vector.extract %212[0, 0, 0] : f32 from vector<1x1x1xf32>
    %cst_78 = arith.constant 1.280000e+02 : f32
    %214 = arith.divf %213, %cst_78 : f32
    %c0_79 = arith.constant 0 : index
    %c5 = arith.constant 5 : index
    %215 = memref.load %arg11[%c0_79, %c5] : memref<1x8xf32, #tpu.memory_space<smem>>
    memref.store %214, %arg11[%c0_79, %c5] : memref<1x8xf32, #tpu.memory_space<smem>>
    %cst_80 = arith.constant dense<0.000000e+00> : vector<128xf32>
    %216 = vector.multi_reduction <add>, %55, %cst_80 [0] : vector<8x128xf32> to vector<128xf32>
    %217 = vector.shape_cast %216 : vector<128xf32> to vector<1x128xf32>
    %cst_81 = arith.constant 8.000000e+00 : f32
    %218 = vector.broadcast %cst_81 : f32 to vector<1x128xf32>
    %219 = arith.divf %217, %218 : vector<1x128xf32>
    %220 = vector.broadcast %219 : vector<1x128xf32> to vector<8x128xf32>
    %221 = arith.subf %55, %220 : vector<8x128xf32>
    %222 = arith.mulf %221, %221 : vector<8x128xf32>
    %cst_82 = arith.constant dense<0.000000e+00> : vector<128xf32>
    %223 = vector.multi_reduction <add>, %222, %cst_82 [0] : vector<8x128xf32> to vector<128xf32>
    %224 = vector.shape_cast %223 : vector<128xf32> to vector<1x128xf32>
    %cst_83 = arith.constant 7.000000e+00 : f32
    %225 = vector.broadcast %cst_83 : f32 to vector<1x128xf32>
    %226 = arith.divf %224, %225 : vector<1x128xf32>
    %227 = math.sqrt %226 : vector<1x128xf32>
    %228 = vector.shape_cast %227 : vector<1x128xf32> to vector<1x1x128xf32>
    %cst_84 = arith.constant dense<0.000000e+00> : vector<1xf32>
    %229 = vector.multi_reduction <add>, %228, %cst_84 [1, 2] : vector<1x1x128xf32> to vector<1xf32>
    %230 = vector.shape_cast %229 : vector<1xf32> to vector<1x1x1xf32>
    %231 = vector.extract %230[0, 0, 0] : f32 from vector<1x1x1xf32>
    %cst_85 = arith.constant 1.280000e+02 : f32
    %232 = arith.divf %231, %cst_85 : f32
    %c0_86 = arith.constant 0 : index
    %c6 = arith.constant 6 : index
    %233 = memref.load %arg11[%c0_86, %c6] : memref<1x8xf32, #tpu.memory_space<smem>>
    memref.store %232, %arg11[%c0_86, %c6] : memref<1x8xf32, #tpu.memory_space<smem>>
    %cst_87 = arith.constant dense<0.000000e+00> : vector<128xf32>
    %234 = vector.multi_reduction <add>, %57, %cst_87 [0] : vector<8x128xf32> to vector<128xf32>
    %235 = vector.shape_cast %234 : vector<128xf32> to vector<1x128xf32>
    %cst_88 = arith.constant 8.000000e+00 : f32
    %236 = vector.broadcast %cst_88 : f32 to vector<1x128xf32>
    %237 = arith.divf %235, %236 : vector<1x128xf32>
    %238 = vector.broadcast %237 : vector<1x128xf32> to vector<8x128xf32>
    %239 = arith.subf %57, %238 : vector<8x128xf32>
    %240 = arith.mulf %239, %239 : vector<8x128xf32>
    %cst_89 = arith.constant dense<0.000000e+00> : vector<128xf32>
    %241 = vector.multi_reduction <add>, %240, %cst_89 [0] : vector<8x128xf32> to vector<128xf32>
    %242 = vector.shape_cast %241 : vector<128xf32> to vector<1x128xf32>
    %cst_90 = arith.constant 7.000000e+00 : f32
    %243 = vector.broadcast %cst_90 : f32 to vector<1x128xf32>
    %244 = arith.divf %242, %243 : vector<1x128xf32>
    %245 = math.sqrt %244 : vector<1x128xf32>
    %246 = vector.shape_cast %245 : vector<1x128xf32> to vector<1x1x128xf32>
    %cst_91 = arith.constant dense<0.000000e+00> : vector<1xf32>
    %247 = vector.multi_reduction <add>, %246, %cst_91 [1, 2] : vector<1x1x128xf32> to vector<1xf32>
    %248 = vector.shape_cast %247 : vector<1xf32> to vector<1x1x1xf32>
    %249 = vector.extract %248[0, 0, 0] : f32 from vector<1x1x1xf32>
    %cst_92 = arith.constant 1.280000e+02 : f32
    %250 = arith.divf %249, %cst_92 : f32
    %c0_93 = arith.constant 0 : index
    %c7 = arith.constant 7 : index
    %251 = memref.load %arg11[%c0_93, %c7] : memref<1x8xf32, #tpu.memory_space<smem>>
    memref.store %250, %arg11[%c0_93, %c7] : memref<1x8xf32, #tpu.memory_space<smem>>
    %c0_94 = arith.constant 0 : index
    %252 = memref.load %arg10[%c0_94] : memref<1xi32, #tpu.memory_space<smem>>
    %253 = tpu.iota {dimensions = array<i32: 1>} : vector<8x256xi32>
    %254 = tpu.iota {dimensions = array<i32: 0>} : vector<8x256xi32>
    %255 = vector.broadcast %252 : i32 to vector<8x256xi32>
    %256 = arith.addi %255, %254 : vector<8x256xi32>
    %257 = arith.cmpi eq, %253, %256 : vector<8x256xi32>
    %258 = arith.extui %257 : vector<8x256xi1> to vector<8x256xi32>
    %259 = arith.sitofp %258 : vector<8x256xi32> to vector<8x256xf32>
    %cst_95 = arith.constant dense<0xFF800000> : vector<256xf32>
    %260 = vector.multi_reduction <maximumf>, %259, %cst_95 [0] : vector<8x256xf32> to vector<256xf32>
    %261 = vector.shape_cast %260 : vector<256xf32> to vector<1x256xf32>
    %cst_96 = arith.constant 1.000000e+00 : f32
    %262 = vector.broadcast %cst_96 : f32 to vector<1x256xf32>
    %263 = arith.subf %262, %261 : vector<1x256xf32>
    %cst_97 = arith.constant dense<0.000000e+00> : vector<128x256xf32>
    %264 = tpu.matmul %55, %259, %cst_97 {dimension_numbers = #tpu.dot_dimension_numbers<[0], [0], [1], [1], [0, 1, 1, 1], [], []>} : vector<8x128xf32>, vector<8x256xf32>, vector<128x256xf32> -> vector<128x256xf32>
    %265 = vector.broadcast %263 : vector<1x256xf32> to vector<128x256xf32>
    %266 = arith.mulf %58, %265 : vector<128x256xf32>
    %267 = arith.addf %266, %264 : vector<128x256xf32>
    %c0_98 = arith.constant 0 : index
    %c0_99 = arith.constant 0 : index
    %268 = vector.load %arg12[%c0_98, %c0_99] : memref<128x256xf32, #tpu.memory_space<vmem>>, vector<128x256xf32>
    tpu.vector_store %arg12[%c0_98, %c0_99], %267 {strides = array<i32>} : memref<128x256xf32, #tpu.memory_space<vmem>>, vector<128x256xf32>,
    return
  }
  func.func @transform_0(%arg0: i32) -> (i32, i32) {
    %c0_i32 = arith.constant 0 : i32
    %c0_i32_0 = arith.constant 0 : i32
    %c0_i32_1 = arith.constant 0 : i32
    return %c0_i32, %c0_i32_0 : i32, i32
  }
  func.func @transform_1(%arg0: i32) -> (i32, i32) {
    %c0_i32 = arith.constant 0 : i32
    %c0_i32_0 = arith.constant 0 : i32
    %c0_i32_1 = arith.constant 0 : i32
    return %c0_i32, %c0_i32_0 : i32, i32
  }
  func.func @transform_2(%arg0: i32) -> (i32, i32) {
    %c0_i32 = arith.constant 0 : i32
    %c0_i32_0 = arith.constant 0 : i32
    %c0_i32_1 = arith.constant 0 : i32
    return %c0_i32, %c0_i32_0 : i32, i32
  }
  func.func @transform_3(%arg0: i32) -> (i32, i32) {
    %c0_i32 = arith.constant 0 : i32
    %c0_i32_0 = arith.constant 0 : i32
    %c0_i32_1 = arith.constant 0 : i32
    return %c0_i32, %c0_i32_0 : i32, i32
  }
  func.func @transform_4(%arg0: i32) -> (i32, i32) {
    %c0_i32 = arith.constant 0 : i32
    %c0_i32_0 = arith.constant 0 : i32
    %c0_i32_1 = arith.constant 0 : i32
    return %c0_i32, %c0_i32_0 : i32, i32
  }
  func.func @transform_5(%arg0: i32) -> (i32, i32) {
    %c0_i32 = arith.constant 0 : i32
    %c0_i32_0 = arith.constant 0 : i32
    %c0_i32_1 = arith.constant 0 : i32
    return %c0_i32, %c0_i32_0 : i32, i32
  }
  func.func @transform_6(%arg0: i32) -> (i32, i32) {
    %c0_i32 = arith.constant 0 : i32
    %c0_i32_0 = arith.constant 0 : i32
    %c0_i32_1 = arith.constant 0 : i32
    return %c0_i32, %c0_i32_0 : i32, i32
  }
  func.func @transform_7(%arg0: i32) -> (i32, i32) {
    %c0_i32 = arith.constant 0 : i32
    %c0_i32_0 = arith.constant 0 : i32
    %c0_i32_1 = arith.constant 0 : i32
    return %c0_i32, %c0_i32_0 : i32, i32
  }
  func.func @transform_8(%arg0: i32) -> (i32, i32) {
    %c0_i32 = arith.constant 0 : i32
    %c0_i32_0 = arith.constant 0 : i32
    %c0_i32_1 = arith.constant 0 : i32
    return %c0_i32, %c0_i32_0 : i32, i32
  }
  func.func @transform_9(%arg0: i32) -> i32 {
    %c0_i32 = arith.constant 0 : i32
    %c0_i32_0 = arith.constant 0 : i32
    return %c0_i32 : i32
  }
  func.func @transform_10(%arg0: i32) -> (i32, i32) {
    %c0_i32 = arith.constant 0 : i32
    %c0_i32_0 = arith.constant 0 : i32
    %c0_i32_1 = arith.constant 0 : i32
    return %c0_i32, %c0_i32_0 : i32, i32
  }
  func.func @transform_11(%arg0: i32) -> (i32, i32) {
    %c0_i32 = arith.constant 0 : i32
    %c0_i32_0 = arith.constant 0 : i32
    %c0_i32_1 = arith.constant 0 : i32
    return %c0_i32, %c0_i32_0 : i32, i32
  }
}

</mosaic_0001>

<llo_original>
// kernel: _device_step.1
$region0: #{_device_step.1}
  #allocation0 [shape = 'u32[]', space=smem, size = 0x4, offset = 0x4, fixed_abs, tag = 'smem constant byte address 0x4 - core index']
  #allocation1 [shape = 'u32[144,128]{1,0:T(1,128)}', space=vmem, size = 0x12000, scoped, tag = 'internal scratch']
  #allocation2 [shape = 's32[1]{0:T(128)S(6)}', space=smem, size = 0x200, scoped, tag = 'scoped memory for _device_step.1']
  %s0 = inlined_call_operand.vmem [shape: s32[384,1], index: 0, kind: input, shape index: {}]
  %s1 = inlined_call_operand.vmem [shape: f32[384,1], index: 1, kind: input, shape index: {}]
  %s2 = inlined_call_operand.vmem [shape: f32[64,128], index: 2, kind: input, shape index: {}]
  %s3 = inlined_call_operand.vmem [shape: f32[64,128], index: 3, kind: input, shape index: {}]
  %s4 = inlined_call_operand.vmem [shape: f32[128,128], index: 4, kind: input, shape index: {}]
  %s5 = inlined_call_operand.vmem [shape: f32[1,128], index: 5, kind: input, shape index: {}]
  %s6 = inlined_call_operand.vmem [shape: f32[128,128], index: 6, kind: input, shape index: {}]
  %s7 = inlined_call_operand.vmem [shape: f32[1,128], index: 7, kind: input, shape index: {}]
  %s8 = inlined_call_operand.vmem [shape: f32[128,256], index: 8, kind: input, shape index: {}, may-alias: {8,11}]
  %s9 = inlined_call_operand.<no memory space> [shape: s32[1], index: 9, kind: input, shape index: {}]
  %s10 = inlined_call_operand.hbm [shape: f32[1,8], index: 10, kind: output, shape index: {0}]
  %s11 = inlined_call_operand.vmem [shape: f32[128,256], index: 11, kind: output, shape index: {1}, may-alias: {8,11}]
  %12 = xla_tuple %s10, %s11
  %s13 = sld [smem:[#allocation0]]
  $region58: #{_device_step.1} parent=0
    _
  %s15 = ssub.s32 1, %s13
  %s16 = scalar_select 0, %s15, %s13
  %17 = sst [smem:[#allocation2]] %s9
  $region1: #{_device_step.1} parent=0
    #allocation3 [shape = 'u8[512]{0}', space=smem, size = 0x200, scoped, tag = 'output window, operand 0, single buffered']
    #allocation4 [shape = 's32[1]{0}', space=sflag, size = 0x4, scoped, tag = 'scoped memory for _device_step.1']
    %18 = vsyncpa [#allocation4], 0
    // Predicated region
    $region2: #{_device_step.1} parent=1 // pred_check
      _
    $region3: #{_device_step.1} parent=1 // pred_check_branch
      %20 = sbr.rel (0) target = $region5
    $region4: #{_device_step.1} parent=1 // pred_region
      _
    $region5: #{_device_step.1} parent=1 // pred_fallthru
      _
    // Predicated region
    $region6: #{_device_step.1} parent=1 // pred_check
      _
    $region7: #{_device_step.1} parent=1 // pred_check_branch
      %22 = sbr.rel (0) target = $region9
    $region8: #{_device_step.1} parent=1 // pred_region
      _
    $region9: #{_device_step.1} parent=1 // pred_fallthru
      _
    // Predicated region
    $region10: #{_device_step.1} parent=1 // pred_check
      _
    $region11: #{_device_step.1} parent=1 // pred_check_branch
      %24 = sbr.rel (0) target = $region13
    $region12: #{_device_step.1} parent=1 // pred_region
      _
    $region13: #{_device_step.1} parent=1 // pred_fallthru
      _
    // Predicated region
    $region14: #{_device_step.1} parent=1 // pred_check
      _
    $region15: #{_device_step.1} parent=1 // pred_check_branch
      %26 = sbr.rel (0) target = $region17
    $region16: #{_device_step.1} parent=1 // pred_region
      _
    $region17: #{_device_step.1} parent=1 // pred_fallthru
      _
    // Predicated region
    $region18: #{_device_step.1} parent=1 // pred_check
      _
    $region19: #{_device_step.1} parent=1 // pred_check_branch
      %28 = sbr.rel (0) target = $region21
    $region20: #{_device_step.1} parent=1 // pred_region
      _
    $region21: #{_device_step.1} parent=1 // pred_fallthru
      _
    // Predicated region
    $region22: #{_device_step.1} parent=1 // pred_check
      _
    $region23: #{_device_step.1} parent=1 // pred_check_branch
      %30 = sbr.rel (0) target = $region25
    $region24: #{_device_step.1} parent=1 // pred_region
      _
    $region25: #{_device_step.1} parent=1 // pred_fallthru
      _
    // Predicated region
    $region26: #{_device_step.1} parent=1 // pred_check
      _
    $region27: #{_device_step.1} parent=1 // pred_check_branch
      %32 = sbr.rel (0) target = $region29
    $region28: #{_device_step.1} parent=1 // pred_region
      _
    $region29: #{_device_step.1} parent=1 // pred_fallthru
      _
    // Predicated region
    $region30: #{_device_step.1} parent=1 // pred_check
      _
    $region31: #{_device_step.1} parent=1 // pred_check_branch
      %34 = sbr.rel (0) target = $region33
    $region32: #{_device_step.1} parent=1 // pred_region
      _
    $region33: #{_device_step.1} parent=1 // pred_fallthru
      _
    // Predicated region
    $region34: #{_device_step.1} parent=1 // pred_check
      _
    $region35: #{_device_step.1} parent=1 // pred_check_branch
      %36 = sbr.rel (0) target = $region37
    $region36: #{_device_step.1} parent=1 // pred_region
      _
    $region37: #{_device_step.1} parent=1 // pred_fallthru
      _
    // Predicated region
    $region38: #{_device_step.1} parent=1 // pred_check
      _
    $region39: #{_device_step.1} parent=1 // pred_check_branch
      %38 = sbr.rel (0) target = $region41
    $region40: #{_device_step.1} parent=1 // pred_region
      _
    $region41: #{_device_step.1} parent=1 // pred_fallthru
      _
    %v39 = vld [vmem:[%s0] sm:$0xff]
    %v40 = vld [vmem:[%s0 + $0x8] sm:$0xff]
    %v41 = vld [vmem:[%s0 + $0x10] sm:$0xff]
    %v42 = vld [vmem:[%s0 + $0x18] sm:$0xff]
    %v43 = vld [vmem:[%s0 + $0x20] sm:$0xff]
    %v44 = vld [vmem:[%s0 + $0x28] sm:$0xff]
    %v45 = vld [vmem:[%s0 + $0x30] sm:$0xff]
    %v46 = vld [vmem:[%s0 + $0x38] sm:$0xff]
    %v47 = vld [vmem:[%s0 + $0x40] sm:$0xff]
    %v48 = vld [vmem:[%s0 + $0x48] sm:$0xff]
    %v49 = vld [vmem:[%s0 + $0x50] sm:$0xff]
    %v50 = vld [vmem:[%s0 + $0x58] sm:$0xff]
    %v51 = vld [vmem:[%s0 + $0x60] sm:$0xff]
    %v52 = vld [vmem:[%s0 + $0x68] sm:$0xff]
    %v53 = vld [vmem:[%s0 + $0x70] sm:$0xff]
    %v54 = vld [vmem:[%s0 + $0x78] sm:$0xff]
    %v55 = vld [vmem:[%s0 + $0x80] sm:$0xff]
    %v56 = vld [vmem:[%s0 + $0x88] sm:$0xff]
    %v57 = vld [vmem:[%s0 + $0x90] sm:$0xff]
    %v58 = vld [vmem:[%s0 + $0x98] sm:$0xff]
    %v59 = vld [vmem:[%s0 + $0xa0] sm:$0xff]
    %v60 = vld [vmem:[%s0 + $0xa8] sm:$0xff]
    %v61 = vld [vmem:[%s0 + $0xb0] sm:$0xff]
    %v62 = vld [vmem:[%s0 + $0xb8] sm:$0xff]
    %v63 = vld [vmem:[%s0 + $0xc0] sm:$0xff]
    %v64 = vld [vmem:[%s0 + $0xc8] sm:$0xff]
    %v65 = vld [vmem:[%s0 + $0xd0] sm:$0xff]
    %v66 = vld [vmem:[%s0 + $0xd8] sm:$0xff]
    %v67 = vld [vmem:[%s0 + $0xe0] sm:$0xff]
    %v68 = vld [vmem:[%s0 + $0xe8] sm:$0xff]
    %v69 = vld [vmem:[%s0 + $0xf0] sm:$0xff]
    %v70 = vld [vmem:[%s0 + $0xf8] sm:$0xff]
    %v71 = vld [vmem:[%s0 + $0x100] sm:$0xff]
    %v72 = vld [vmem:[%s0 + $0x108] sm:$0xff]
    %v73 = vld [vmem:[%s0 + $0x110] sm:$0xff]
    %v74 = vld [vmem:[%s0 + $0x118] sm:$0xff]
    %v75 = vld [vmem:[%s0 + $0x120] sm:$0xff]
    %v76 = vld [vmem:[%s0 + $0x128] sm:$0xff]
    %v77 = vld [vmem:[%s0 + $0x130] sm:$0xff]
    %v78 = vld [vmem:[%s0 + $0x138] sm:$0xff]
    %v79 = vld [vmem:[%s0 + $0x140] sm:$0xff]
    %v80 = vld [vmem:[%s0 + $0x148] sm:$0xff]
    %v81 = vld [vmem:[%s0 + $0x150] sm:$0xff]
    %v82 = vld [vmem:[%s0 + $0x158] sm:$0xff]
    %v83 = vld [vmem:[%s0 + $0x160] sm:$0xff]
    %v84 = vld [vmem:[%s0 + $0x168] sm:$0xff]
    %v85 = vld [vmem:[%s0 + $0x170] sm:$0xff]
    %v86 = vld [vmem:[%s0 + $0x178] sm:$0xff]
    %v87 = vld [vmem:[%s1] sm:$0xff]
    %v88 = vld [vmem:[%s1 + $0x8] sm:$0xff]
    %v89 = vld [vmem:[%s1 + $0x10] sm:$0xff]
    %v90 = vld [vmem:[%s1 + $0x18] sm:$0xff]
    %v91 = vld [vmem:[%s1 + $0x20] sm:$0xff]
    %v92 = vld [vmem:[%s1 + $0x28] sm:$0xff]
    %v93 = vld [vmem:[%s1 + $0x30] sm:$0xff]
    %v94 = vld [vmem:[%s1 + $0x38] sm:$0xff]
    %v95 = vld [vmem:[%s1 + $0x40] sm:$0xff]
    %v96 = vld [vmem:[%s1 + $0x48] sm:$0xff]
    %v97 = vld [vmem:[%s1 + $0x50] sm:$0xff]
    %v98 = vld [vmem:[%s1 + $0x58] sm:$0xff]
    %v99 = vld [vmem:[%s1 + $0x60] sm:$0xff]
    %v100 = vld [vmem:[%s1 + $0x68] sm:$0xff]
    %v101 = vld [vmem:[%s1 + $0x70] sm:$0xff]
    %v102 = vld [vmem:[%s1 + $0x78] sm:$0xff]
    %v103 = vld [vmem:[%s1 + $0x80] sm:$0xff]
    %v104 = vld [vmem:[%s1 + $0x88] sm:$0xff]
    %v105 = vld [vmem:[%s1 + $0x90] sm:$0xff]
    %v106 = vld [vmem:[%s1 + $0x98] sm:$0xff]
    %v107 = vld [vmem:[%s1 + $0xa0] sm:$0xff]
    %v108 = vld [vmem:[%s1 + $0xa8] sm:$0xff]
    %v109 = vld [vmem:[%s1 + $0xb0] sm:$0xff]
    %v110 = vld [vmem:[%s1 + $0xb8] sm:$0xff]
    %v111 = vld [vmem:[%s1 + $0xc0] sm:$0xff]
    %v112 = vld [vmem:[%s1 + $0xc8] sm:$0xff]
    %v113 = vld [vmem:[%s1 + $0xd0] sm:$0xff]
    %v114 = vld [vmem:[%s1 + $0xd8] sm:$0xff]
    %v115 = vld [vmem:[%s1 + $0xe0] sm:$0xff]
    %v116 = vld [vmem:[%s1 + $0xe8] sm:$0xff]
    %v117 = vld [vmem:[%s1 + $0xf0] sm:$0xff]
    %v118 = vld [vmem:[%s1 + $0xf8] sm:$0xff]
    %v119 = vld [vmem:[%s1 + $0x100] sm:$0xff]
    %v120 = vld [vmem:[%s1 + $0x108] sm:$0xff]
    %v121 = vld [vmem:[%s1 + $0x110] sm:$0xff]
    %v122 = vld [vmem:[%s1 + $0x118] sm:$0xff]
    %v123 = vld [vmem:[%s1 + $0x120] sm:$0xff]
    %v124 = vld [vmem:[%s1 + $0x128] sm:$0xff]
    %v125 = vld [vmem:[%s1 + $0x130] sm:$0xff]
    %v126 = vld [vmem:[%s1 + $0x138] sm:$0xff]
    %v127 = vld [vmem:[%s1 + $0x140] sm:$0xff]
    %v128 = vld [vmem:[%s1 + $0x148] sm:$0xff]
    %v129 = vld [vmem:[%s1 + $0x150] sm:$0xff]
    %v130 = vld [vmem:[%s1 + $0x158] sm:$0xff]
    %v131 = vld [vmem:[%s1 + $0x160] sm:$0xff]
    %v132 = vld [vmem:[%s1 + $0x168] sm:$0xff]
    %v133 = vld [vmem:[%s1 + $0x170] sm:$0xff]
    %v134 = vld [vmem:[%s1 + $0x178] sm:$0xff]
    %v135 = vlaneseq
    %v136 = vshrl.u32 %v135, 7
    %v137 = vadd.s32 %v136, 8
    %v138 = vadd.s32 %v136, 16
    %v139 = vadd.s32 %v136, 24
    %v140 = vadd.s32 %v136, 32
    %v141 = vadd.s32 %v136, 40
    %v142 = vadd.s32 %v136, 48
    %v143 = vadd.s32 %v136, 56
    %v144 = vadd.s32 %v136, 64
    %v145 = vadd.s32 %v136, 72
    %v146 = vadd.s32 %v136, 80
    %v147 = vadd.s32 %v136, 88
    %v148 = vadd.s32 %v136, 96
    %v149 = vadd.s32 %v136, 104
    %v150 = vadd.s32 %v136, 112
    %v151 = vadd.s32 %v136, 120
    %v152 = vadd.s32 %v136, 128
    %v153 = vadd.s32 %v136, 136
    %v154 = vadd.s32 %v136, 144
    %v155 = vadd.s32 %v136, 152
    %v156 = vadd.s32 %v136, 160
    %v157 = vadd.s32 %v136, 168
    %v158 = vadd.s32 %v136, 176
    %v159 = vadd.s32 %v136, 184
    %v160 = vadd.s32 %v136, 192
    %v161 = vadd.s32 %v136, 200
    %v162 = vadd.s32 %v136, 208
    %v163 = vadd.s32 %v136, 216
    %v164 = vadd.s32 %v136, 224
    %v165 = vadd.s32 %v136, 232
    %v166 = vadd.s32 %v136, 240
    %v167 = vadd.s32 %v136, 248
    %v168 = vadd.s32 %v136, 256
    %v169 = vadd.s32 %v136, 264
    %v170 = vadd.s32 %v136, 272
    %v171 = vadd.s32 %v136, 280
    %v172 = vadd.s32 %v136, 288
    %v173 = vadd.s32 %v136, 296
    %v174 = vadd.s32 %v136, 304
    %v175 = vadd.s32 %v136, 312
    %v176 = vadd.s32 %v136, 320
    %v177 = vadd.s32 %v136, 328
    %v178 = vadd.s32 %v136, 336
    %v179 = vadd.s32 %v136, 344
    %v180 = vadd.s32 %v136, 352
    %v181 = vadd.s32 %v136, 360
    %v182 = vadd.s32 %v136, 368
    %v183 = vadd.s32 %v136, 376
    %vm184 = vcmp.ge.s32.totalorder %v136, 256
    %vm185 = vcmp.ge.s32.totalorder %v137, 256
    %vm186 = vcmp.ge.s32.totalorder %v138, 256
    %vm187 = vcmp.ge.s32.totalorder %v139, 256
    %vm188 = vcmp.ge.s32.totalorder %v140, 256
    %vm189 = vcmp.ge.s32.totalorder %v141, 256
    %vm190 = vcmp.ge.s32.totalorder %v142, 256
    %vm191 = vcmp.ge.s32.totalorder %v143, 256
    %vm192 = vcmp.ge.s32.totalorder %v144, 256
    %vm193 = vcmp.ge.s32.totalorder %v145, 256
    %vm194 = vcmp.ge.s32.totalorder %v146, 256
    %vm195 = vcmp.ge.s32.totalorder %v147, 256
    %vm196 = vcmp.ge.s32.totalorder %v148, 256
    %vm197 = vcmp.ge.s32.totalorder %v149, 256
    %vm198 = vcmp.ge.s32.totalorder %v150, 256
    %vm199 = vcmp.ge.s32.totalorder %v151, 256
    %vm200 = vcmp.ge.s32.totalorder %v152, 256
    %vm201 = vcmp.ge.s32.totalorder %v153, 256
    %vm202 = vcmp.ge.s32.totalorder %v154, 256
    %vm203 = vcmp.ge.s32.totalorder %v155, 256
    %vm204 = vcmp.ge.s32.totalorder %v156, 256
    %vm205 = vcmp.ge.s32.totalorder %v157, 256
    %vm206 = vcmp.ge.s32.totalorder %v158, 256
    %vm207 = vcmp.ge.s32.totalorder %v159, 256
    %vm208 = vcmp.ge.s32.totalorder %v160, 256
    %vm209 = vcmp.ge.s32.totalorder %v161, 256
    %vm210 = vcmp.ge.s32.totalorder %v162, 256
    %vm211 = vcmp.ge.s32.totalorder %v163, 256
    %vm212 = vcmp.ge.s32.totalorder %v164, 256
    %vm213 = vcmp.ge.s32.totalorder %v165, 256
    %vm214 = vcmp.ge.s32.totalorder %v166, 256
    %vm215 = vcmp.ge.s32.totalorder %v167, 256
    %vm216 = vcmp.ge.s32.totalorder %v168, 256
    %vm217 = vcmp.ge.s32.totalorder %v169, 256
    %vm218 = vcmp.ge.s32.totalorder %v170, 256
    %vm219 = vcmp.ge.s32.totalorder %v171, 256
    %vm220 = vcmp.ge.s32.totalorder %v172, 256
    %vm221 = vcmp.ge.s32.totalorder %v173, 256
    %vm222 = vcmp.ge.s32.totalorder %v174, 256
    %vm223 = vcmp.ge.s32.totalorder %v175, 256
    %vm224 = vcmp.ge.s32.totalorder %v176, 256
    %vm225 = vcmp.ge.s32.totalorder %v177, 256
    %vm226 = vcmp.ge.s32.totalorder %v178, 256
    %vm227 = vcmp.ge.s32.totalorder %v179, 256
    %vm228 = vcmp.ge.s32.totalorder %v180, 256
    %vm229 = vcmp.ge.s32.totalorder %v181, 256
    %vm230 = vcmp.ge.s32.totalorder %v182, 256
    %vm231 = vcmp.ge.s32.totalorder %v183, 256
    %v232 = vsel %vm184, 64, 0
    %v233 = vsel %vm185, 64, 0
    %v234 = vsel %vm186, 64, 0
    %v235 = vsel %vm187, 64, 0
    %v236 = vsel %vm188, 64, 0
    %v237 = vsel %vm189, 64, 0
    %v238 = vsel %vm190, 64, 0
    %v239 = vsel %vm191, 64, 0
    %v240 = vsel %vm192, 64, 0
    %v241 = vsel %vm193, 64, 0
    %v242 = vsel %vm194, 64, 0
    %v243 = vsel %vm195, 64, 0
    %v244 = vsel %vm196, 64, 0
    %v245 = vsel %vm197, 64, 0
    %v246 = vsel %vm198, 64, 0
    %v247 = vsel %vm199, 64, 0
    %v248 = vsel %vm200, 64, 0
    %v249 = vsel %vm201, 64, 0
    %v250 = vsel %vm202, 64, 0
    %v251 = vsel %vm203, 64, 0
    %v252 = vsel %vm204, 64, 0
    %v253 = vsel %vm205, 64, 0
    %v254 = vsel %vm206, 64, 0
    %v255 = vsel %vm207, 64, 0
    %v256 = vsel %vm208, 64, 0
    %v257 = vsel %vm209, 64, 0
    %v258 = vsel %vm210, 64, 0
    %v259 = vsel %vm211, 64, 0
    %v260 = vsel %vm212, 64, 0
    %v261 = vsel %vm213, 64, 0
    %v262 = vsel %vm214, 64, 0
    %v263 = vsel %vm215, 64, 0
    %v264 = vsel %vm216, 64, 0
    %v265 = vsel %vm217, 64, 0
    %v266 = vsel %vm218, 64, 0
    %v267 = vsel %vm219, 64, 0
    %v268 = vsel %vm220, 64, 0
    %v269 = vsel %vm221, 64, 0
    %v270 = vsel %vm222, 64, 0
    %v271 = vsel %vm223, 64, 0
    %v272 = vsel %vm224, 64, 0
    %v273 = vsel %vm225, 64, 0
    %v274 = vsel %vm226, 64, 0
    %v275 = vsel %vm227, 64, 0
    %v276 = vsel %vm228, 64, 0
    %v277 = vsel %vm229, 64, 0
    %v278 = vsel %vm230, 64, 0
    %v279 = vsel %vm231, 64, 0
    %v280 = vadd.s32 %v39, %v232
    %v281 = vadd.s32 %v40, %v233
    %v282 = vadd.s32 %v41, %v234
    %v283 = vadd.s32 %v42, %v235
    %v284 = vadd.s32 %v43, %v236
    %v285 = vadd.s32 %v44, %v237
    %v286 = vadd.s32 %v45, %v238
    %v287 = vadd.s32 %v46, %v239
    %v288 = vadd.s32 %v47, %v240
    %v289 = vadd.s32 %v48, %v241
    %v290 = vadd.s32 %v49, %v242
    %v291 = vadd.s32 %v50, %v243
    %v292 = vadd.s32 %v51, %v244
    %v293 = vadd.s32 %v52, %v245
    %v294 = vadd.s32 %v53, %v246
    %v295 = vadd.s32 %v54, %v247
    %v296 = vadd.s32 %v55, %v248
    %v297 = vadd.s32 %v56, %v249
    %v298 = vadd.s32 %v57, %v250
    %v299 = vadd.s32 %v58, %v251
    %v300 = vadd.s32 %v59, %v252
    %v301 = vadd.s32 %v60, %v253
    %v302 = vadd.s32 %v61, %v254
    %v303 = vadd.s32 %v62, %v255
    %v304 = vadd.s32 %v63, %v256
    %v305 = vadd.s32 %v64, %v257
    %v306 = vadd.s32 %v65, %v258
    %v307 = vadd.s32 %v66, %v259
    %v308 = vadd.s32 %v67, %v260
    %v309 = vadd.s32 %v68, %v261
    %v310 = vadd.s32 %v69, %v262
    %v311 = vadd.s32 %v70, %v263
    %v312 = vadd.s32 %v71, %v264
    %v313 = vadd.s32 %v72, %v265
    %v314 = vadd.s32 %v73, %v266
    %v315 = vadd.s32 %v74, %v267
    %v316 = vadd.s32 %v75, %v268
    %v317 = vadd.s32 %v76, %v269
    %v318 = vadd.s32 %v77, %v270
    %v319 = vadd.s32 %v78, %v271
    %v320 = vadd.s32 %v79, %v272
    %v321 = vadd.s32 %v80, %v273
    %v322 = vadd.s32 %v81, %v274
    %v323 = vadd.s32 %v82, %v275
    %v324 = vadd.s32 %v83, %v276
    %v325 = vadd.s32 %v84, %v277
    %v326 = vadd.s32 %v85, %v278
    %v327 = vadd.s32 %v86, %v279
    %v328 = vlaneseq
    %v329 = vand.u32 %v328, 127
    %330 = vset.pattern.permute.xlu0 0
    %331 = vperm.xlu0 %330, %v280
    %v332 = vpop.permute.xlu0 %331
    %333 = vset.pattern.permute.xlu0 0
    %334 = vperm.xlu0 %333, %v281
    %v335 = vpop.permute.xlu0 %334
    %336 = vset.pattern.permute.xlu0 0
    %337 = vperm.xlu0 %336, %v282
    %v338 = vpop.permute.xlu0 %337
    %339 = vset.pattern.permute.xlu0 0
    %340 = vperm.xlu0 %339, %v283
    %v341 = vpop.permute.xlu0 %340
    %342 = vset.pattern.permute.xlu0 0
    %343 = vperm.xlu0 %342, %v284
    %v344 = vpop.permute.xlu0 %343
    %345 = vset.pattern.permute.xlu0 0
    %346 = vperm.xlu0 %345, %v285
    %v347 = vpop.permute.xlu0 %346
    %348 = vset.pattern.permute.xlu0 0
    %349 = vperm.xlu0 %348, %v286
    %v350 = vpop.permute.xlu0 %349
    %351 = vset.pattern.permute.xlu0 0
    %352 = vperm.xlu0 %351, %v287
    %v353 = vpop.permute.xlu0 %352
    %354 = vset.pattern.permute.xlu0 0
    %355 = vperm.xlu0 %354, %v288
    %v356 = vpop.permute.xlu0 %355
    %357 = vset.pattern.permute.xlu0 0
    %358 = vperm.xlu0 %357, %v289
    %v359 = vpop.permute.xlu0 %358
    %360 = vset.pattern.permute.xlu0 0
    %361 = vperm.xlu0 %360, %v290
    %v362 = vpop.permute.xlu0 %361
    %363 = vset.pattern.permute.xlu0 0
    %364 = vperm.xlu0 %363, %v291
    %v365 = vpop.permute.xlu0 %364
    %366 = vset.pattern.permute.xlu0 0
    %367 = vperm.xlu0 %366, %v292
    %v368 = vpop.permute.xlu0 %367
    %369 = vset.pattern.permute.xlu0 0
    %370 = vperm.xlu0 %369, %v293
    %v371 = vpop.permute.xlu0 %370
    %372 = vset.pattern.permute.xlu0 0
    %373 = vperm.xlu0 %372, %v294
    %v374 = vpop.permute.xlu0 %373
    %375 = vset.pattern.permute.xlu0 0
    %376 = vperm.xlu0 %375, %v295
    %v377 = vpop.permute.xlu0 %376
    %378 = vset.pattern.permute.xlu0 0
    %379 = vperm.xlu0 %378, %v296
    %v380 = vpop.permute.xlu0 %379
    %381 = vset.pattern.permute.xlu0 0
    %382 = vperm.xlu0 %381, %v297
    %v383 = vpop.permute.xlu0 %382
    %384 = vset.pattern.permute.xlu0 0
    %385 = vperm.xlu0 %384, %v298
    %v386 = vpop.permute.xlu0 %385
    %387 = vset.pattern.permute.xlu0 0
    %388 = vperm.xlu0 %387, %v299
    %v389 = vpop.permute.xlu0 %388
    %390 = vset.pattern.permute.xlu0 0
    %391 = vperm.xlu0 %390, %v300
    %v392 = vpop.permute.xlu0 %391
    %393 = vset.pattern.permute.xlu0 0
    %394 = vperm.xlu0 %393, %v301
    %v395 = vpop.permute.xlu0 %394
    %396 = vset.pattern.permute.xlu0 0
    %397 = vperm.xlu0 %396, %v302
    %v398 = vpop.permute.xlu0 %397
    %399 = vset.pattern.permute.xlu0 0
    %400 = vperm.xlu0 %399, %v303
    %v401 = vpop.permute.xlu0 %400
    %402 = vset.pattern.permute.xlu0 0
    %403 = vperm.xlu0 %402, %v304
    %v404 = vpop.permute.xlu0 %403
    %405 = vset.pattern.permute.xlu0 0
    %406 = vperm.xlu0 %405, %v305
    %v407 = vpop.permute.xlu0 %406
    %408 = vset.pattern.permute.xlu0 0
    %409 = vperm.xlu0 %408, %v306
    %v410 = vpop.permute.xlu0 %409
    %411 = vset.pattern.permute.xlu0 0
    %412 = vperm.xlu0 %411, %v307
    %v413 = vpop.permute.xlu0 %412
    %414 = vset.pattern.permute.xlu0 0
    %415 = vperm.xlu0 %414, %v308
    %v416 = vpop.permute.xlu0 %415
    %417 = vset.pattern.permute.xlu0 0
    %418 = vperm.xlu0 %417, %v309
    %v419 = vpop.permute.xlu0 %418
    %420 = vset.pattern.permute.xlu0 0
    %421 = vperm.xlu0 %420, %v310
    %v422 = vpop.permute.xlu0 %421
    %423 = vset.pattern.permute.xlu0 0
    %424 = vperm.xlu0 %423, %v311
    %v425 = vpop.permute.xlu0 %424
    %426 = vset.pattern.permute.xlu0 0
    %427 = vperm.xlu0 %426, %v312
    %v428 = vpop.permute.xlu0 %427
    %429 = vset.pattern.permute.xlu0 0
    %430 = vperm.xlu0 %429, %v313
    %v431 = vpop.permute.xlu0 %430
    %432 = vset.pattern.permute.xlu0 0
    %433 = vperm.xlu0 %432, %v314
    %v434 = vpop.permute.xlu0 %433
    %435 = vset.pattern.permute.xlu0 0
    %436 = vperm.xlu0 %435, %v315
    %v437 = vpop.permute.xlu0 %436
    %438 = vset.pattern.permute.xlu0 0
    %439 = vperm.xlu0 %438, %v316
    %v440 = vpop.permute.xlu0 %439
    %441 = vset.pattern.permute.xlu0 0
    %442 = vperm.xlu0 %441, %v317
    %v443 = vpop.permute.xlu0 %442
    %444 = vset.pattern.permute.xlu0 0
    %445 = vperm.xlu0 %444, %v318
    %v446 = vpop.permute.xlu0 %445
    %447 = vset.pattern.permute.xlu0 0
    %448 = vperm.xlu0 %447, %v319
    %v449 = vpop.permute.xlu0 %448
    %450 = vset.pattern.permute.xlu0 0
    %451 = vperm.xlu0 %450, %v320
    %v452 = vpop.permute.xlu0 %451
    %453 = vset.pattern.permute.xlu0 0
    %454 = vperm.xlu0 %453, %v321
    %v455 = vpop.permute.xlu0 %454
    %456 = vset.pattern.permute.xlu0 0
    %457 = vperm.xlu0 %456, %v322
    %v458 = vpop.permute.xlu0 %457
    %459 = vset.pattern.permute.xlu0 0
    %460 = vperm.xlu0 %459, %v323
    %v461 = vpop.permute.xlu0 %460
    %462 = vset.pattern.permute.xlu0 0
    %463 = vperm.xlu0 %462, %v324
    %v464 = vpop.permute.xlu0 %463
    %465 = vset.pattern.permute.xlu0 0
    %466 = vperm.xlu0 %465, %v325
    %v467 = vpop.permute.xlu0 %466
    %468 = vset.pattern.permute.xlu0 0
    %469 = vperm.xlu0 %468, %v326
    %v470 = vpop.permute.xlu0 %469
    %471 = vset.pattern.permute.xlu0 0
    %472 = vperm.xlu0 %471, %v327
    %v473 = vpop.permute.xlu0 %472
    %vm474 = vcmp.eq.s32.totalorder %v329, %v332
    %vm475 = vcmp.eq.s32.totalorder %v329, %v335
    %vm476 = vcmp.eq.s32.totalorder %v329, %v338
    %vm477 = vcmp.eq.s32.totalorder %v329, %v341
    %vm478 = vcmp.eq.s32.totalorder %v329, %v344
    %vm479 = vcmp.eq.s32.totalorder %v329, %v347
    %vm480 = vcmp.eq.s32.totalorder %v329, %v350
    %vm481 = vcmp.eq.s32.totalorder %v329, %v353
    %vm482 = vcmp.eq.s32.totalorder %v329, %v356
    %vm483 = vcmp.eq.s32.totalorder %v329, %v359
    %vm484 = vcmp.eq.s32.totalorder %v329, %v362
    %vm485 = vcmp.eq.s32.totalorder %v329, %v365
    %vm486 = vcmp.eq.s32.totalorder %v329, %v368
    %vm487 = vcmp.eq.s32.totalorder %v329, %v371
    %vm488 = vcmp.eq.s32.totalorder %v329, %v374
    %vm489 = vcmp.eq.s32.totalorder %v329, %v377
    %vm490 = vcmp.eq.s32.totalorder %v329, %v380
    %vm491 = vcmp.eq.s32.totalorder %v329, %v383
    %vm492 = vcmp.eq.s32.totalorder %v329, %v386
    %vm493 = vcmp.eq.s32.totalorder %v329, %v389
    %vm494 = vcmp.eq.s32.totalorder %v329, %v392
    %vm495 = vcmp.eq.s32.totalorder %v329, %v395
    %vm496 = vcmp.eq.s32.totalorder %v329, %v398
    %vm497 = vcmp.eq.s32.totalorder %v329, %v401
    %vm498 = vcmp.eq.s32.totalorder %v329, %v404
    %vm499 = vcmp.eq.s32.totalorder %v329, %v407
    %vm500 = vcmp.eq.s32.totalorder %v329, %v410
    %vm501 = vcmp.eq.s32.totalorder %v329, %v413
    %vm502 = vcmp.eq.s32.totalorder %v329, %v416
    %vm503 = vcmp.eq.s32.totalorder %v329, %v419
    %vm504 = vcmp.eq.s32.totalorder %v329, %v422
    %vm505 = vcmp.eq.s32.totalorder %v329, %v425
    %vm506 = vcmp.eq.s32.totalorder %v329, %v428
    %vm507 = vcmp.eq.s32.totalorder %v329, %v431
    %vm508 = vcmp.eq.s32.totalorder %v329, %v434
    %vm509 = vcmp.eq.s32.totalorder %v329, %v437
    %vm510 = vcmp.eq.s32.totalorder %v329, %v440
    %vm511 = vcmp.eq.s32.totalorder %v329, %v443
    %vm512 = vcmp.eq.s32.totalorder %v329, %v446
    %vm513 = vcmp.eq.s32.totalorder %v329, %v449
    %vm514 = vcmp.eq.s32.totalorder %v329, %v452
    %vm515 = vcmp.eq.s32.totalorder %v329, %v455
    %vm516 = vcmp.eq.s32.totalorder %v329, %v458
    %vm517 = vcmp.eq.s32.totalorder %v329, %v461
    %vm518 = vcmp.eq.s32.totalorder %v329, %v464
    %vm519 = vcmp.eq.s32.totalorder %v329, %v467
    %vm520 = vcmp.eq.s32.totalorder %v329, %v470
    %vm521 = vcmp.eq.s32.totalorder %v329, %v473
    %v522 = vsel %vm474, 1, 0
    %v523 = vsel %vm475, 1, 0
    %v524 = vsel %vm476, 1, 0
    %v525 = vsel %vm477, 1, 0
    %v526 = vsel %vm478, 1, 0
    %v527 = vsel %vm479, 1, 0
    %v528 = vsel %vm480, 1, 0
    %v529 = vsel %vm481, 1, 0
    %v530 = vsel %vm482, 1, 0
    %v531 = vsel %vm483, 1, 0
    %v532 = vsel %vm484, 1, 0
    %v533 = vsel %vm485, 1, 0
    %v534 = vsel %vm486, 1, 0
    %v535 = vsel %vm487, 1, 0
    %v536 = vsel %vm488, 1, 0
    %v537 = vsel %vm489, 1, 0
    %v538 = vsel %vm490, 1, 0
    %v539 = vsel %vm491, 1, 0
    %v540 = vsel %vm492, 1, 0
    %v541 = vsel %vm493, 1, 0
    %v542 = vsel %vm494, 1, 0
    %v543 = vsel %vm495, 1, 0
    %v544 = vsel %vm496, 1, 0
    %v545 = vsel %vm497, 1, 0
    %v546 = vsel %vm498, 1, 0
    %v547 = vsel %vm499, 1, 0
    %v548 = vsel %vm500, 1, 0
    %v549 = vsel %vm501, 1, 0
    %v550 = vsel %vm502, 1, 0
    %v551 = vsel %vm503, 1, 0
    %v552 = vsel %vm504, 1, 0
    %v553 = vsel %vm505, 1, 0
    %v554 = vsel %vm506, 1, 0
    %v555 = vsel %vm507, 1, 0
    %v556 = vsel %vm508, 1, 0
    %v557 = vsel %vm509, 1, 0
    %v558 = vsel %vm510, 1, 0
    %v559 = vsel %vm511, 1, 0
    %v560 = vsel %vm512, 1, 0
    %v561 = vsel %vm513, 1, 0
    %v562 = vsel %vm514, 1, 0
    %v563 = vsel %vm515, 1, 0
    %v564 = vsel %vm516, 1, 0
    %v565 = vsel %vm517, 1, 0
    %v566 = vsel %vm518, 1, 0
    %v567 = vsel %vm519, 1, 0
    %v568 = vsel %vm520, 1, 0
    %v569 = vsel %vm521, 1, 0
    %v570 = vcvt.s32.f32 %v522
    %v571 = vcvt.s32.f32 %v523
    %v572 = vcvt.s32.f32 %v524
    %v573 = vcvt.s32.f32 %v525
    %v574 = vcvt.s32.f32 %v526
    %v575 = vcvt.s32.f32 %v527
    %v576 = vcvt.s32.f32 %v528
    %v577 = vcvt.s32.f32 %v529
    %v578 = vcvt.s32.f32 %v530
    %v579 = vcvt.s32.f32 %v531
    %v580 = vcvt.s32.f32 %v532
    %v581 = vcvt.s32.f32 %v533
    %v582 = vcvt.s32.f32 %v534
    %v583 = vcvt.s32.f32 %v535
    %v584 = vcvt.s32.f32 %v536
    %v585 = vcvt.s32.f32 %v537
    %v586 = vcvt.s32.f32 %v538
    %v587 = vcvt.s32.f32 %v539
    %v588 = vcvt.s32.f32 %v540
    %v589 = vcvt.s32.f32 %v541
    %v590 = vcvt.s32.f32 %v542
    %v591 = vcvt.s32.f32 %v543
    %v592 = vcvt.s32.f32 %v544
    %v593 = vcvt.s32.f32 %v545
    %v594 = vcvt.s32.f32 %v546
    %v595 = vcvt.s32.f32 %v547
    %v596 = vcvt.s32.f32 %v548
    %v597 = vcvt.s32.f32 %v549
    %v598 = vcvt.s32.f32 %v550
    %v599 = vcvt.s32.f32 %v551
    %v600 = vcvt.s32.f32 %v552
    %v601 = vcvt.s32.f32 %v553
    %v602 = vcvt.s32.f32 %v554
    %v603 = vcvt.s32.f32 %v555
    %v604 = vcvt.s32.f32 %v556
    %v605 = vcvt.s32.f32 %v557
    %v606 = vcvt.s32.f32 %v558
    %v607 = vcvt.s32.f32 %v559
    %v608 = vcvt.s32.f32 %v560
    %v609 = vcvt.s32.f32 %v561
    %v610 = vcvt.s32.f32 %v562
    %v611 = vcvt.s32.f32 %v563
    %v612 = vcvt.s32.f32 %v564
    %v613 = vcvt.s32.f32 %v565
    %v614 = vcvt.s32.f32 %v566
    %v615 = vcvt.s32.f32 %v567
    %v616 = vcvt.s32.f32 %v568
    %v617 = vcvt.s32.f32 %v569
    %619 = vset.pattern.permute.xlu0 0
    %620 = vperm.xlu0 %619, %v87
    %v621 = vpop.permute.xlu0 %620
    %624 = vset.pattern.permute.xlu0 0
    %625 = vperm.xlu0 %624, %v88
    %v626 = vpop.permute.xlu0 %625
    %629 = vset.pattern.permute.xlu0 0
    %630 = vperm.xlu0 %629, %v89
    %v631 = vpop.permute.xlu0 %630
    %634 = vset.pattern.permute.xlu0 0
    %635 = vperm.xlu0 %634, %v90
    %v636 = vpop.permute.xlu0 %635
    %639 = vset.pattern.permute.xlu0 0
    %640 = vperm.xlu0 %639, %v91
    %v641 = vpop.permute.xlu0 %640
    %644 = vset.pattern.permute.xlu0 0
    %645 = vperm.xlu0 %644, %v92
    %v646 = vpop.permute.xlu0 %645
    %649 = vset.pattern.permute.xlu0 0
    %650 = vperm.xlu0 %649, %v93
    %v651 = vpop.permute.xlu0 %650
    %654 = vset.pattern.permute.xlu0 0
    %655 = vperm.xlu0 %654, %v94
    %v656 = vpop.permute.xlu0 %655
    %659 = vset.pattern.permute.xlu0 0
    %660 = vperm.xlu0 %659, %v95
    %v661 = vpop.permute.xlu0 %660
    %664 = vset.pattern.permute.xlu0 0
    %665 = vperm.xlu0 %664, %v96
    %v666 = vpop.permute.xlu0 %665
    %669 = vset.pattern.permute.xlu0 0
    %670 = vperm.xlu0 %669, %v97
    %v671 = vpop.permute.xlu0 %670
    %674 = vset.pattern.permute.xlu0 0
    %675 = vperm.xlu0 %674, %v98
    %v676 = vpop.permute.xlu0 %675
    %679 = vset.pattern.permute.xlu0 0
    %680 = vperm.xlu0 %679, %v99
    %v681 = vpop.permute.xlu0 %680
    %684 = vset.pattern.permute.xlu0 0
    %685 = vperm.xlu0 %684, %v100
    %v686 = vpop.permute.xlu0 %685
    %689 = vset.pattern.permute.xlu0 0
    %690 = vperm.xlu0 %689, %v101
    %v691 = vpop.permute.xlu0 %690
    %694 = vset.pattern.permute.xlu0 0
    %695 = vperm.xlu0 %694, %v102
    %v696 = vpop.permute.xlu0 %695
    %699 = vset.pattern.permute.xlu0 0
    %700 = vperm.xlu0 %699, %v103
    %v701 = vpop.permute.xlu0 %700
    %704 = vset.pattern.permute.xlu0 0
    %705 = vperm.xlu0 %704, %v104
    %v706 = vpop.permute.xlu0 %705
    %709 = vset.pattern.permute.xlu0 0
    %710 = vperm.xlu0 %709, %v105
    %v711 = vpop.permute.xlu0 %710
    %714 = vset.pattern.permute.xlu0 0
    %715 = vperm.xlu0 %714, %v106
    %v716 = vpop.permute.xlu0 %715
    %719 = vset.pattern.permute.xlu0 0
    %720 = vperm.xlu0 %719, %v107
    %v721 = vpop.permute.xlu0 %720
    %724 = vset.pattern.permute.xlu0 0
    %725 = vperm.xlu0 %724, %v108
    %v726 = vpop.permute.xlu0 %725
    %729 = vset.pattern.permute.xlu0 0
    %730 = vperm.xlu0 %729, %v109
    %v731 = vpop.permute.xlu0 %730
    %734 = vset.pattern.permute.xlu0 0
    %735 = vperm.xlu0 %734, %v110
    %v736 = vpop.permute.xlu0 %735
    %739 = vset.pattern.permute.xlu0 0
    %740 = vperm.xlu0 %739, %v111
    %v741 = vpop.permute.xlu0 %740
    %744 = vset.pattern.permute.xlu0 0
    %745 = vperm.xlu0 %744, %v112
    %v746 = vpop.permute.xlu0 %745
    %749 = vset.pattern.permute.xlu0 0
    %750 = vperm.xlu0 %749, %v113
    %v751 = vpop.permute.xlu0 %750
    %754 = vset.pattern.permute.xlu0 0
    %755 = vperm.xlu0 %754, %v114
    %v756 = vpop.permute.xlu0 %755
    %759 = vset.pattern.permute.xlu0 0
    %760 = vperm.xlu0 %759, %v115
    %v761 = vpop.permute.xlu0 %760
    %764 = vset.pattern.permute.xlu0 0
    %765 = vperm.xlu0 %764, %v116
    %v766 = vpop.permute.xlu0 %765
    %769 = vset.pattern.permute.xlu0 0
    %770 = vperm.xlu0 %769, %v117
    %v771 = vpop.permute.xlu0 %770
    %774 = vset.pattern.permute.xlu0 0
    %775 = vperm.xlu0 %774, %v118
    %v776 = vpop.permute.xlu0 %775
    %779 = vset.pattern.permute.xlu0 0
    %780 = vperm.xlu0 %779, %v119
    %v781 = vpop.permute.xlu0 %780
    %784 = vset.pattern.permute.xlu0 0
    %785 = vperm.xlu0 %784, %v120
    %v786 = vpop.permute.xlu0 %785
    %789 = vset.pattern.permute.xlu0 0
    %790 = vperm.xlu0 %789, %v121
    %v791 = vpop.permute.xlu0 %790
    %794 = vset.pattern.permute.xlu0 0
    %795 = vperm.xlu0 %794, %v122
    %v796 = vpop.permute.xlu0 %795
    %799 = vset.pattern.permute.xlu0 0
    %800 = vperm.xlu0 %799, %v123
    %v801 = vpop.permute.xlu0 %800
    %804 = vset.pattern.permute.xlu0 0
    %805 = vperm.xlu0 %804, %v124
    %v806 = vpop.permute.xlu0 %805
    %809 = vset.pattern.permute.xlu0 0
    %810 = vperm.xlu0 %809, %v125
    %v811 = vpop.permute.xlu0 %810
    %814 = vset.pattern.permute.xlu0 0
    %815 = vperm.xlu0 %814, %v126
    %v816 = vpop.permute.xlu0 %815
    %819 = vset.pattern.permute.xlu0 0
    %820 = vperm.xlu0 %819, %v127
    %v821 = vpop.permute.xlu0 %820
    %824 = vset.pattern.permute.xlu0 0
    %825 = vperm.xlu0 %824, %v128
    %v826 = vpop.permute.xlu0 %825
    %829 = vset.pattern.permute.xlu0 0
    %830 = vperm.xlu0 %829, %v129
    %v831 = vpop.permute.xlu0 %830
    %834 = vset.pattern.permute.xlu0 0
    %835 = vperm.xlu0 %834, %v130
    %v836 = vpop.permute.xlu0 %835
    %839 = vset.pattern.permute.xlu0 0
    %840 = vperm.xlu0 %839, %v131
    %v841 = vpop.permute.xlu0 %840
    %844 = vset.pattern.permute.xlu0 0
    %845 = vperm.xlu0 %844, %v132
    %v846 = vpop.permute.xlu0 %845
    %849 = vset.pattern.permute.xlu0 0
    %850 = vperm.xlu0 %849, %v133
    %v851 = vpop.permute.xlu0 %850
    %854 = vset.pattern.permute.xlu0 0
    %855 = vperm.xlu0 %854, %v134
    %v856 = vpop.permute.xlu0 %855
    %v858 = vmul.f32 %v570, %v621
    %v859 = vmul.f32 %v571, %v626
    %v860 = vmul.f32 %v572, %v631
    %v861 = vmul.f32 %v573, %v636
    %v862 = vmul.f32 %v574, %v641
    %v863 = vmul.f32 %v575, %v646
    %v864 = vmul.f32 %v576, %v651
    %v865 = vmul.f32 %v577, %v656
    %v866 = vmul.f32 %v578, %v661
    %v867 = vmul.f32 %v579, %v666
    %v868 = vmul.f32 %v580, %v671
    %v869 = vmul.f32 %v581, %v676
    %v870 = vmul.f32 %v582, %v681
    %v871 = vmul.f32 %v583, %v686
    %v872 = vmul.f32 %v584, %v691
    %v873 = vmul.f32 %v585, %v696
    %v874 = vmul.f32 %v586, %v701
    %v875 = vmul.f32 %v587, %v706
    %v876 = vmul.f32 %v588, %v711
    %v877 = vmul.f32 %v589, %v716
    %v878 = vmul.f32 %v590, %v721
    %v879 = vmul.f32 %v591, %v726
    %v880 = vmul.f32 %v592, %v731
    %v881 = vmul.f32 %v593, %v736
    %v882 = vmul.f32 %v594, %v741
    %v883 = vmul.f32 %v595, %v746
    %v884 = vmul.f32 %v596, %v751
    %v885 = vmul.f32 %v597, %v756
    %v886 = vmul.f32 %v598, %v761
    %v887 = vmul.f32 %v599, %v766
    %v888 = vmul.f32 %v600, %v771
    %v889 = vmul.f32 %v601, %v776
    %v890 = vmul.f32 %v602, %v781
    %v891 = vmul.f32 %v603, %v786
    %v892 = vmul.f32 %v604, %v791
    %v893 = vmul.f32 %v605, %v796
    %v894 = vmul.f32 %v606, %v801
    %v895 = vmul.f32 %v607, %v806
    %v896 = vmul.f32 %v608, %v811
    %v897 = vmul.f32 %v609, %v816
    %v898 = vmul.f32 %v610, %v821
    %v899 = vmul.f32 %v611, %v826
    %v900 = vmul.f32 %v612, %v831
    %v901 = vmul.f32 %v613, %v836
    %v902 = vmul.f32 %v614, %v841
    %v903 = vmul.f32 %v615, %v846
    %v904 = vmul.f32 %v616, %v851
    %v905 = vmul.f32 %v617, %v856
    %v906 = vadd.f32 %v858, %v859
    %v907 = vrot.slane %v906, 4
    %v908 = vadd.f32 %v906, %v907
    %v909 = vrot.slane %v908, 2
    %v910 = vadd.f32 %v908, %v909
    %v911 = vrot.slane %v910, 1
    %v912 = vadd.f32 %v910, %v911
    %v913 = vadd.f32 %v860, %v861
    %v914 = vrot.slane %v913, 4
    %v915 = vadd.f32 %v913, %v914
    %v916 = vrot.slane %v915, 2
    %v917 = vadd.f32 %v915, %v916
    %v918 = vrot.slane %v917, 1
    %v919 = vadd.f32 %v917, %v918
    %v920 = vadd.f32 %v862, %v863
    %v921 = vrot.slane %v920, 4
    %v922 = vadd.f32 %v920, %v921
    %v923 = vrot.slane %v922, 2
    %v924 = vadd.f32 %v922, %v923
    %v925 = vrot.slane %v924, 1
    %v926 = vadd.f32 %v924, %v925
    %v927 = vadd.f32 %v864, %v865
    %v928 = vrot.slane %v927, 4
    %v929 = vadd.f32 %v927, %v928
    %v930 = vrot.slane %v929, 2
    %v931 = vadd.f32 %v929, %v930
    %v932 = vrot.slane %v931, 1
    %v933 = vadd.f32 %v931, %v932
    %v934 = vadd.f32 %v866, %v867
    %v935 = vrot.slane %v934, 4
    %v936 = vadd.f32 %v934, %v935
    %v937 = vrot.slane %v936, 2
    %v938 = vadd.f32 %v936, %v937
    %v939 = vrot.slane %v938, 1
    %v940 = vadd.f32 %v938, %v939
    %v941 = vadd.f32 %v868, %v869
    %v942 = vrot.slane %v941, 4
    %v943 = vadd.f32 %v941, %v942
    %v944 = vrot.slane %v943, 2
    %v945 = vadd.f32 %v943, %v944
    %v946 = vrot.slane %v945, 1
    %v947 = vadd.f32 %v945, %v946
    %v948 = vadd.f32 %v870, %v871
    %v949 = vrot.slane %v948, 4
    %v950 = vadd.f32 %v948, %v949
    %v951 = vrot.slane %v950, 2
    %v952 = vadd.f32 %v950, %v951
    %v953 = vrot.slane %v952, 1
    %v954 = vadd.f32 %v952, %v953
    %v955 = vadd.f32 %v872, %v873
    %v956 = vrot.slane %v955, 4
    %v957 = vadd.f32 %v955, %v956
    %v958 = vrot.slane %v957, 2
    %v959 = vadd.f32 %v957, %v958
    %v960 = vrot.slane %v959, 1
    %v961 = vadd.f32 %v959, %v960
    %v962 = vadd.f32 %v874, %v875
    %v963 = vrot.slane %v962, 4
    %v964 = vadd.f32 %v962, %v963
    %v965 = vrot.slane %v964, 2
    %v966 = vadd.f32 %v964, %v965
    %v967 = vrot.slane %v966, 1
    %v968 = vadd.f32 %v966, %v967
    %v969 = vadd.f32 %v876, %v877
    %v970 = vrot.slane %v969, 4
    %v971 = vadd.f32 %v969, %v970
    %v972 = vrot.slane %v971, 2
    %v973 = vadd.f32 %v971, %v972
    %v974 = vrot.slane %v973, 1
    %v975 = vadd.f32 %v973, %v974
    %v976 = vadd.f32 %v878, %v879
    %v977 = vrot.slane %v976, 4
    %v978 = vadd.f32 %v976, %v977
    %v979 = vrot.slane %v978, 2
    %v980 = vadd.f32 %v978, %v979
    %v981 = vrot.slane %v980, 1
    %v982 = vadd.f32 %v980, %v981
    %v983 = vadd.f32 %v880, %v881
    %v984 = vrot.slane %v983, 4
    %v985 = vadd.f32 %v983, %v984
    %v986 = vrot.slane %v985, 2
    %v987 = vadd.f32 %v985, %v986
    %v988 = vrot.slane %v987, 1
    %v989 = vadd.f32 %v987, %v988
    %v990 = vadd.f32 %v882, %v883
    %v991 = vrot.slane %v990, 4
    %v992 = vadd.f32 %v990, %v991
    %v993 = vrot.slane %v992, 2
    %v994 = vadd.f32 %v992, %v993
    %v995 = vrot.slane %v994, 1
    %v996 = vadd.f32 %v994, %v995
    %v997 = vadd.f32 %v884, %v885
    %v998 = vrot.slane %v997, 4
    %v999 = vadd.f32 %v997, %v998
    %v1000 = vrot.slane %v999, 2
    %v1001 = vadd.f32 %v999, %v1000
    %v1002 = vrot.slane %v1001, 1
    %v1003 = vadd.f32 %v1001, %v1002
    %v1004 = vadd.f32 %v886, %v887
    %v1005 = vrot.slane %v1004, 4
    %v1006 = vadd.f32 %v1004, %v1005
    %v1007 = vrot.slane %v1006, 2
    %v1008 = vadd.f32 %v1006, %v1007
    %v1009 = vrot.slane %v1008, 1
    %v1010 = vadd.f32 %v1008, %v1009
    %v1011 = vadd.f32 %v888, %v889
    %v1012 = vrot.slane %v1011, 4
    %v1013 = vadd.f32 %v1011, %v1012
    %v1014 = vrot.slane %v1013, 2
    %v1015 = vadd.f32 %v1013, %v1014
    %v1016 = vrot.slane %v1015, 1
    %v1017 = vadd.f32 %v1015, %v1016
    %v1018 = vadd.f32 %v890, %v891
    %v1019 = vrot.slane %v1018, 4
    %v1020 = vadd.f32 %v1018, %v1019
    %v1021 = vrot.slane %v1020, 2
    %v1022 = vadd.f32 %v1020, %v1021
    %v1023 = vrot.slane %v1022, 1
    %v1024 = vadd.f32 %v1022, %v1023
    %v1025 = vadd.f32 %v892, %v893
    %v1026 = vrot.slane %v1025, 4
    %v1027 = vadd.f32 %v1025, %v1026
    %v1028 = vrot.slane %v1027, 2
    %v1029 = vadd.f32 %v1027, %v1028
    %v1030 = vrot.slane %v1029, 1
    %v1031 = vadd.f32 %v1029, %v1030
    %v1032 = vadd.f32 %v894, %v895
    %v1033 = vrot.slane %v1032, 4
    %v1034 = vadd.f32 %v1032, %v1033
    %v1035 = vrot.slane %v1034, 2
    %v1036 = vadd.f32 %v1034, %v1035
    %v1037 = vrot.slane %v1036, 1
    %v1038 = vadd.f32 %v1036, %v1037
    %v1039 = vadd.f32 %v896, %v897
    %v1040 = vrot.slane %v1039, 4
    %v1041 = vadd.f32 %v1039, %v1040
    %v1042 = vrot.slane %v1041, 2
    %v1043 = vadd.f32 %v1041, %v1042
    %v1044 = vrot.slane %v1043, 1
    %v1045 = vadd.f32 %v1043, %v1044
    %v1046 = vadd.f32 %v898, %v899
    %v1047 = vrot.slane %v1046, 4
    %v1048 = vadd.f32 %v1046, %v1047
    %v1049 = vrot.slane %v1048, 2
    %v1050 = vadd.f32 %v1048, %v1049
    %v1051 = vrot.slane %v1050, 1
    %v1052 = vadd.f32 %v1050, %v1051
    %v1053 = vadd.f32 %v900, %v901
    %v1054 = vrot.slane %v1053, 4
    %v1055 = vadd.f32 %v1053, %v1054
    %v1056 = vrot.slane %v1055, 2
    %v1057 = vadd.f32 %v1055, %v1056
    %v1058 = vrot.slane %v1057, 1
    %v1059 = vadd.f32 %v1057, %v1058
    %v1060 = vadd.f32 %v902, %v903
    %v1061 = vrot.slane %v1060, 4
    %v1062 = vadd.f32 %v1060, %v1061
    %v1063 = vrot.slane %v1062, 2
    %v1064 = vadd.f32 %v1062, %v1063
    %v1065 = vrot.slane %v1064, 1
    %v1066 = vadd.f32 %v1064, %v1065
    %v1067 = vadd.f32 %v904, %v905
    %v1068 = vrot.slane %v1067, 4
    %v1069 = vadd.f32 %v1067, %v1068
    %v1070 = vrot.slane %v1069, 2
    %v1071 = vadd.f32 %v1069, %v1070
    %v1072 = vrot.slane %v1071, 1
    %v1073 = vadd.f32 %v1071, %v1072
    %v1074 = vld [vmem:[%s2] sm:$0xff]
    %v1075 = vld [vmem:[%s2 + $0x8] sm:$0xff]
    %v1076 = vld [vmem:[%s2 + $0x10] sm:$0xff]
    %v1077 = vld [vmem:[%s2 + $0x18] sm:$0xff]
    %v1078 = vld [vmem:[%s2 + $0x20] sm:$0xff]
    %v1079 = vld [vmem:[%s2 + $0x28] sm:$0xff]
    %v1080 = vld [vmem:[%s2 + $0x30] sm:$0xff]
    %v1081 = vld [vmem:[%s2 + $0x38] sm:$0xff]
    %v1082 = vld [vmem:[%s3] sm:$0xff]
    %v1083 = vld [vmem:[%s3 + $0x8] sm:$0xff]
    %v1084 = vld [vmem:[%s3 + $0x10] sm:$0xff]
    %v1085 = vld [vmem:[%s3 + $0x18] sm:$0xff]
    %v1086 = vld [vmem:[%s3 + $0x20] sm:$0xff]
    %v1087 = vld [vmem:[%s3 + $0x28] sm:$0xff]
    %v1088 = vld [vmem:[%s3 + $0x30] sm:$0xff]
    %v1089 = vld [vmem:[%s3 + $0x38] sm:$0xff]
    %vm1114 = vcmask 1041409
    %v1115 = vsel %vm1114, %v919, %v912
    %vm1116 = vcmask 1042434
    %v1117 = vsel %vm1116, %v926, %v1115
    %vm1118 = vcmask 1043459
    %v1119 = vsel %vm1118, %v933, %v1117
    %vm1120 = vcmask 1044484
    %v1121 = vsel %vm1120, %v940, %v1119
    %vm1122 = vcmask 1045509
    %v1123 = vsel %vm1122, %v947, %v1121
    %vm1124 = vcmask 1046534
    %v1125 = vsel %vm1124, %v954, %v1123
    %vm1126 = vcmask 1047559
    %v1127 = vsel %vm1126, %v961, %v1125
    %v1128 = vsel %vm1114, %v975, %v968
    %v1129 = vsel %vm1116, %v982, %v1128
    %v1130 = vsel %vm1118, %v989, %v1129
    %v1131 = vsel %vm1120, %v996, %v1130
    %v1132 = vsel %vm1122, %v1003, %v1131
    %v1133 = vsel %vm1124, %v1010, %v1132
    %v1134 = vsel %vm1126, %v1017, %v1133
    %v1135 = vsel %vm1114, %v1031, %v1024
    %v1136 = vsel %vm1116, %v1038, %v1135
    %v1137 = vsel %vm1118, %v1045, %v1136
    %v1138 = vsel %vm1120, %v1052, %v1137
    %v1139 = vsel %vm1122, %v1059, %v1138
    %v1140 = vsel %vm1124, %v1066, %v1139
    %v1141 = vsel %vm1126, %v1073, %v1140
    %1145 = vmatprep.subr.mxu0 0.0
    %1146 = vmatpush1.msra.mxu0 %v1074
    %1147 = vmatprep.subr.mxu0 0.0
    %1148 = vmatpush1.msra.mxu0 %v1075
    %1149 = vmatprep.subr.mxu0 0.0
    %1150 = vmatpush1.msra.mxu0 %v1076
    %1151 = vmatprep.subr.mxu0 0.0
    %1152 = vmatpush1.msra.mxu0 %v1077
    %1153 = vmatprep.subr.mxu0 0.0
    %1154 = vmatpush1.msra.mxu0 %v1078
    %1155 = vmatprep.subr.mxu0 0.0
    %1156 = vmatpush1.msra.mxu0 %v1079
    %1157 = vmatprep.subr.mxu0 0.0
    %1158 = vmatpush1.msra.mxu0 %v1080
    %1159 = vmatprep.subr.mxu0 0.0
    %1160 = vmatpush1.msra.mxu0 %v1081
    %1161 = vmatprep.subr.mxu0 0.0
    %1162 = vmatpush1.msra.mxu0 %v1082
    %1163 = vmatprep.subr.mxu0 0.0
    %1164 = vmatpush1.msra.mxu0 %v1083
    %1165 = vmatprep.subr.mxu0 0.0
    %1166 = vmatpush1.msra.mxu0 %v1084
    %1167 = vmatprep.subr.mxu0 0.0
    %1168 = vmatpush1.msra.mxu0 %v1085
    %1169 = vmatprep.subr.mxu0 0.0
    %1170 = vmatpush1.msra.mxu0 %v1086
    %1171 = vmatprep.subr.mxu0 0.0
    %1172 = vmatpush1.msra.mxu0 %v1087
    %1173 = vmatprep.subr.mxu0 0.0
    %1174 = vmatpush1.msra.mxu0 %v1088
    %1175 = vmatprep.subr.mxu0 0.0
    %1176 = vmatpush1.msra.mxu0 %v1089
    %1177 = vmatprep.subr.mxu0 0.0
    %1178 = vmatpush1.msra.mxu0 0.0
    %1179 = vmatprep.subr.mxu0 0.0
    %1180 = vmatpush1.msra.mxu0 0.0
    %1181 = vmatprep.subr.mxu0 0.0
    %1182 = vmatpush1.msra.mxu0 0.0
    %1183 = vmatprep.subr.mxu0 0.0
    %1184 = vmatpush1.msra.mxu0 0.0
    %1185 = vmatprep.subr.mxu0 0.0
    %1186 = vmatpush1.msra.mxu0 0.0
    %1187 = vmatprep.subr.mxu0 0.0
    %1188 = vmatpush1.msra.mxu0 0.0
    %1189 = vmatprep.subr.mxu0 0.0
    %1190 = vmatpush1.msra.mxu0 0.0
    %1191 = vmatprep.subr.mxu0 0.0
    %1192 = vmatpush1.msra.mxu0 0.0
    %1193 = vmatprep.subr.mxu0 0.0
    %1194 = vmatpush1.msra.mxu0 0.0
    %1195 = vmatprep.subr.mxu0 0.0
    %1196 = vmatpush1.msra.mxu0 0.0
    %1197 = vmatprep.subr.mxu0 0.0
    %1198 = vmatpush1.msra.mxu0 0.0
    %1199 = vmatprep.subr.mxu0 0.0
    %1200 = vmatpush1.msra.mxu0 0.0
    %1201 = vmatprep.subr.mxu0 0.0
    %1202 = vmatpush1.msra.mxu0 0.0
    %1203 = vmatprep.subr.mxu0 0.0
    %1204 = vmatpush1.msra.mxu0 0.0
    %1205 = vmatprep.subr.mxu0 0.0
    %1206 = vmatpush1.msra.mxu0 0.0
    %1207 = vmatprep.subr.mxu0 0.0
    %1208 = vmatpush1.msra.mxu0 0.0
    %1209 = vmatprep.mubr.f32.mxu0 0.0
    %1210 = vmatmul.mubr.f32.gmra.mrb[0].mxu0 %v1127
    %v1211 = vpop.f32.mrb[0].mxu0
    %v1212 = vadd.f32 0.0, %v1211
    %v1213 = vpop.f32.mrb[0].mxu0
    %1214 = vmatprep.mubr.f32.mxu0 0.0
    %1215 = vmatmul.mubr.f32.gmra.mrb[0].mxu0 %v1134
    %v1216 = vpop.f32.mrb[0].mxu0
    %v1217 = vadd.f32 0.0, %v1216
    %v1218 = vpop.f32.mrb[0].mxu0
    %1219 = vmatprep.mubr.f32.mxu0 0.0
    %1220 = vmatmul.mubr.f32.gmra.mrb[0].mxu0 %v1141
    %v1221 = vpop.f32.mrb[0].mxu0
    %v1222 = vadd.f32 0.0, %v1221
    %v1223 = vpop.f32.mrb[0].mxu0
    %1224 = vdwg.mxu0
    %1225 = vadd.xlane.f32.xlu0 %v1127
    %v1226 = vpop.xlane.xlu0 %1225
    %1227 = vadd.xlane.f32.xlu0 %v1134
    %v1228 = vpop.xlane.xlu0 %1227
    %1229 = vadd.xlane.f32.xlu0 %v1141
    %v1230 = vpop.xlane.xlu0 %1229
    %v1231 = vmax.f32 %v1226, 1e-09
    %v1232 = vmax.f32 %v1228, 1e-09
    %v1233 = vmax.f32 %v1230, 1e-09
    %v1234 = vrcp.pop %v1231
    %v1235 = vmul.f32 %v1212, %v1234
    %v1236 = vrcp.pop %v1232
    %v1237 = vmul.f32 %v1217, %v1236
    %v1238 = vrcp.pop %v1233
    %v1239 = vmul.f32 %v1222, %v1238
    %v1240 = vld [vmem:[%s4] sm:$0xff]
    %v1241 = vld [vmem:[%s4 + $0x8] sm:$0xff]
    %v1242 = vld [vmem:[%s4 + $0x10] sm:$0xff]
    %v1243 = vld [vmem:[%s4 + $0x18] sm:$0xff]
    %v1244 = vld [vmem:[%s4 + $0x20] sm:$0xff]
    %v1245 = vld [vmem:[%s4 + $0x28] sm:$0xff]
    %v1246 = vld [vmem:[%s4 + $0x30] sm:$0xff]
    %v1247 = vld [vmem:[%s4 + $0x38] sm:$0xff]
    %v1248 = vld [vmem:[%s4 + $0x40] sm:$0xff]
    %v1249 = vld [vmem:[%s4 + $0x48] sm:$0xff]
    %v1250 = vld [vmem:[%s4 + $0x50] sm:$0xff]
    %v1251 = vld [vmem:[%s4 + $0x58] sm:$0xff]
    %v1252 = vld [vmem:[%s4 + $0x60] sm:$0xff]
    %v1253 = vld [vmem:[%s4 + $0x68] sm:$0xff]
    %v1254 = vld [vmem:[%s4 + $0x70] sm:$0xff]
    %v1255 = vld [vmem:[%s4 + $0x78] sm:$0xff]
    %v1256 = vld [vmem:[%s5] sm:$0x1]
    %v1258 = vlaneseq
    %v1259 = vshrl.u32 %v1258, 7
    %v1260 = vsub.s32 0, %v1259
    %v1261 = vrot.slane %v1256, %v1260
    %1263 = vmatprep.subr.mxu0 0.0
    %1264 = vmatpush1.msra.mxu0 %v1240
    %1265 = vmatprep.subr.mxu0 0.0
    %1266 = vmatpush1.msra.mxu0 %v1241
    %1267 = vmatprep.subr.mxu0 0.0
    %1268 = vmatpush1.msra.mxu0 %v1242
    %1269 = vmatprep.subr.mxu0 0.0
    %1270 = vmatpush1.msra.mxu0 %v1243
    %1271 = vmatprep.subr.mxu0 0.0
    %1272 = vmatpush1.msra.mxu0 %v1244
    %1273 = vmatprep.subr.mxu0 0.0
    %1274 = vmatpush1.msra.mxu0 %v1245
    %1275 = vmatprep.subr.mxu0 0.0
    %1276 = vmatpush1.msra.mxu0 %v1246
    %1277 = vmatprep.subr.mxu0 0.0
    %1278 = vmatpush1.msra.mxu0 %v1247
    %1279 = vmatprep.subr.mxu0 0.0
    %1280 = vmatpush1.msra.mxu0 %v1248
    %1281 = vmatprep.subr.mxu0 0.0
    %1282 = vmatpush1.msra.mxu0 %v1249
    %1283 = vmatprep.subr.mxu0 0.0
    %1284 = vmatpush1.msra.mxu0 %v1250
    %1285 = vmatprep.subr.mxu0 0.0
    %1286 = vmatpush1.msra.mxu0 %v1251
    %1287 = vmatprep.subr.mxu0 0.0
    %1288 = vmatpush1.msra.mxu0 %v1252
    %1289 = vmatprep.subr.mxu0 0.0
    %1290 = vmatpush1.msra.mxu0 %v1253
    %1291 = vmatprep.subr.mxu0 0.0
    %1292 = vmatpush1.msra.mxu0 %v1254
    %1293 = vmatprep.subr.mxu0 0.0
    %1294 = vmatpush1.msra.mxu0 %v1255
    %1295 = vmatprep.subr.mxu0 0.0
    %1296 = vmatpush1.msra.mxu0 0.0
    %1297 = vmatprep.subr.mxu0 0.0
    %1298 = vmatpush1.msra.mxu0 0.0
    %1299 = vmatprep.subr.mxu0 0.0
    %1300 = vmatpush1.msra.mxu0 0.0
    %1301 = vmatprep.subr.mxu0 0.0
    %1302 = vmatpush1.msra.mxu0 0.0
    %1303 = vmatprep.subr.mxu0 0.0
    %1304 = vmatpush1.msra.mxu0 0.0
    %1305 = vmatprep.subr.mxu0 0.0
    %1306 = vmatpush1.msra.mxu0 0.0
    %1307 = vmatprep.subr.mxu0 0.0
    %1308 = vmatpush1.msra.mxu0 0.0
    %1309 = vmatprep.subr.mxu0 0.0
    %1310 = vmatpush1.msra.mxu0 0.0
    %1311 = vmatprep.subr.mxu0 0.0
    %1312 = vmatpush1.msra.mxu0 0.0
    %1313 = vmatprep.subr.mxu0 0.0
    %1314 = vmatpush1.msra.mxu0 0.0
    %1315 = vmatprep.subr.mxu0 0.0
    %1316 = vmatpush1.msra.mxu0 0.0
    %1317 = vmatprep.subr.mxu0 0.0
    %1318 = vmatpush1.msra.mxu0 0.0
    %1319 = vmatprep.subr.mxu0 0.0
    %1320 = vmatpush1.msra.mxu0 0.0
    %1321 = vmatprep.subr.mxu0 0.0
    %1322 = vmatpush1.msra.mxu0 0.0
    %1323 = vmatprep.subr.mxu0 0.0
    %1324 = vmatpush1.msra.mxu0 0.0
    %1325 = vmatprep.subr.mxu0 0.0
    %1326 = vmatpush1.msra.mxu0 0.0
    %1327 = vmatprep.mubr.f32.mxu0 0.0
    %1328 = vmatmul.mubr.f32.gmra.mrb[0].mxu0 %v1235
    %v1329 = vpop.f32.mrb[0].mxu0
    %v1330 = vadd.f32 %v1261, %v1329
    %v1331 = vpop.f32.mrb[0].mxu0
    %1332 = vmatprep.mubr.f32.mxu0 0.0
    %1333 = vmatmul.mubr.f32.gmra.mrb[0].mxu0 %v1237
    %v1334 = vpop.f32.mrb[0].mxu0
    %v1335 = vadd.f32 %v1261, %v1334
    %v1336 = vpop.f32.mrb[0].mxu0
    %1337 = vdwg.mxu0
    %v1338 = vld [vmem:[%s6] sm:$0xff]
    %v1339 = vld [vmem:[%s6 + $0x8] sm:$0xff]
    %v1340 = vld [vmem:[%s6 + $0x10] sm:$0xff]
    %v1341 = vld [vmem:[%s6 + $0x18] sm:$0xff]
    %v1342 = vld [vmem:[%s6 + $0x20] sm:$0xff]
    %v1343 = vld [vmem:[%s6 + $0x28] sm:$0xff]
    %v1344 = vld [vmem:[%s6 + $0x30] sm:$0xff]
    %v1345 = vld [vmem:[%s6 + $0x38] sm:$0xff]
    %v1346 = vld [vmem:[%s6 + $0x40] sm:$0xff]
    %v1347 = vld [vmem:[%s6 + $0x48] sm:$0xff]
    %v1348 = vld [vmem:[%s6 + $0x50] sm:$0xff]
    %v1349 = vld [vmem:[%s6 + $0x58] sm:$0xff]
    %v1350 = vld [vmem:[%s6 + $0x60] sm:$0xff]
    %v1351 = vld [vmem:[%s6 + $0x68] sm:$0xff]
    %v1352 = vld [vmem:[%s6 + $0x70] sm:$0xff]
    %v1353 = vld [vmem:[%s6 + $0x78] sm:$0xff]
    %v1354 = vld [vmem:[%s7] sm:$0x1]
    %v1356 = vlaneseq
    %v1357 = vshrl.u32 %v1356, 7
    %v1358 = vsub.s32 0, %v1357
    %v1359 = vrot.slane %v1354, %v1358
    %1361 = vmatprep.subr.mxu0 0.0
    %1362 = vmatpush1.msra.mxu0 %v1338
    %1363 = vmatprep.subr.mxu0 0.0
    %1364 = vmatpush1.msra.mxu0 %v1339
    %1365 = vmatprep.subr.mxu0 0.0
    %1366 = vmatpush1.msra.mxu0 %v1340
    %1367 = vmatprep.subr.mxu0 0.0
    %1368 = vmatpush1.msra.mxu0 %v1341
    %1369 = vmatprep.subr.mxu0 0.0
    %1370 = vmatpush1.msra.mxu0 %v1342
    %1371 = vmatprep.subr.mxu0 0.0
    %1372 = vmatpush1.msra.mxu0 %v1343
    %1373 = vmatprep.subr.mxu0 0.0
    %1374 = vmatpush1.msra.mxu0 %v1344
    %1375 = vmatprep.subr.mxu0 0.0
    %1376 = vmatpush1.msra.mxu0 %v1345
    %1377 = vmatprep.subr.mxu0 0.0
    %1378 = vmatpush1.msra.mxu0 %v1346
    %1379 = vmatprep.subr.mxu0 0.0
    %1380 = vmatpush1.msra.mxu0 %v1347
    %1381 = vmatprep.subr.mxu0 0.0
    %1382 = vmatpush1.msra.mxu0 %v1348
    %1383 = vmatprep.subr.mxu0 0.0
    %1384 = vmatpush1.msra.mxu0 %v1349
    %1385 = vmatprep.subr.mxu0 0.0
    %1386 = vmatpush1.msra.mxu0 %v1350
    %1387 = vmatprep.subr.mxu0 0.0
    %1388 = vmatpush1.msra.mxu0 %v1351
    %1389 = vmatprep.subr.mxu0 0.0
    %1390 = vmatpush1.msra.mxu0 %v1352
    %1391 = vmatprep.subr.mxu0 0.0
    %1392 = vmatpush1.msra.mxu0 %v1353
    %1393 = vmatprep.subr.mxu0 0.0
    %1394 = vmatpush1.msra.mxu0 0.0
    %1395 = vmatprep.subr.mxu0 0.0
    %1396 = vmatpush1.msra.mxu0 0.0
    %1397 = vmatprep.subr.mxu0 0.0
    %1398 = vmatpush1.msra.mxu0 0.0
    %1399 = vmatprep.subr.mxu0 0.0
    %1400 = vmatpush1.msra.mxu0 0.0
    %1401 = vmatprep.subr.mxu0 0.0
    %1402 = vmatpush1.msra.mxu0 0.0
    %1403 = vmatprep.subr.mxu0 0.0
    %1404 = vmatpush1.msra.mxu0 0.0
    %1405 = vmatprep.subr.mxu0 0.0
    %1406 = vmatpush1.msra.mxu0 0.0
    %1407 = vmatprep.subr.mxu0 0.0
    %1408 = vmatpush1.msra.mxu0 0.0
    %1409 = vmatprep.subr.mxu0 0.0
    %1410 = vmatpush1.msra.mxu0 0.0
    %1411 = vmatprep.subr.mxu0 0.0
    %1412 = vmatpush1.msra.mxu0 0.0
    %1413 = vmatprep.subr.mxu0 0.0
    %1414 = vmatpush1.msra.mxu0 0.0
    %1415 = vmatprep.subr.mxu0 0.0
    %1416 = vmatpush1.msra.mxu0 0.0
    %1417 = vmatprep.subr.mxu0 0.0
    %1418 = vmatpush1.msra.mxu0 0.0
    %1419 = vmatprep.subr.mxu0 0.0
    %1420 = vmatpush1.msra.mxu0 0.0
    %1421 = vmatprep.subr.mxu0 0.0
    %1422 = vmatpush1.msra.mxu0 0.0
    %1423 = vmatprep.subr.mxu0 0.0
    %1424 = vmatpush1.msra.mxu0 0.0
    %1425 = vmatprep.mubr.f32.mxu0 0.0
    %1426 = vmatmul.mubr.f32.gmra.mrb[0].mxu0 %v1239
    %v1427 = vpop.f32.mrb[0].mxu0
    %v1428 = vadd.f32 %v1359, %v1427
    %v1429 = vpop.f32.mrb[0].mxu0
    %1430 = vdwg.mxu0
    %v1431 = vmul.f32 %v1330, %v1330
    %v1432 = vmul.f32 %v1335, %v1335
    %1433 = vadd.xlane.f32.xlu0 %v1431
    %v1434 = vpop.xlane.xlu0 %1433
    %1435 = vadd.xlane.f32.xlu0 %v1432
    %v1436 = vpop.xlane.xlu0 %1435
    %v1437 = vrsqrt.pop %v1434
    %v1438 = vmul.f32 %v1434, %v1437
    %vm1439 = vcmp.eq.f32.partialorder %v1434, inf
    %v1440 = vsel %vm1439, %v1434, %v1438
    %vm1441 = vcmp.eq.f32.partialorder %v1434, 0.0
    %v1442 = vand.u32 %v1434, 2147483648
    %v1443 = vsel %vm1441, %v1442, %v1440
    %v1444 = vrsqrt.pop %v1436
    %v1445 = vmul.f32 %v1436, %v1444
    %vm1446 = vcmp.eq.f32.partialorder %v1436, inf
    %v1447 = vsel %vm1446, %v1436, %v1445
    %vm1448 = vcmp.eq.f32.partialorder %v1436, 0.0
    %v1449 = vand.u32 %v1436, 2147483648
    %v1450 = vsel %vm1448, %v1449, %v1447
    %v1451 = vmax.f32 %v1443, 1e-12
    %v1452 = vmax.f32 %v1450, 1e-12
    %v1453 = vrcp.pop %v1451
    %v1454 = vmul.f32 %v1330, %v1453
    %v1455 = vrcp.pop %v1452
    %v1456 = vmul.f32 %v1335, %v1455
    %v1457 = vmul.f32 %v1428, %v1428
    %1458 = vadd.xlane.f32.xlu0 %v1457
    %v1459 = vpop.xlane.xlu0 %1458
    %v1460 = vrsqrt.pop %v1459
    %v1461 = vmul.f32 %v1459, %v1460
    %vm1462 = vcmp.eq.f32.partialorder %v1459, inf
    %v1463 = vsel %vm1462, %v1459, %v1461
    %vm1464 = vcmp.eq.f32.partialorder %v1459, 0.0
    %v1465 = vand.u32 %v1459, 2147483648
    %v1466 = vsel %vm1464, %v1465, %v1463
    %v1467 = vmax.f32 %v1466, 1e-12
    %v1468 = vrcp.pop %v1467
    %v1469 = vmul.f32 %v1428, %v1468
    %v1470 = vld [vmem:[%s8] sm:$0xff]
    %v1471 = vld [vmem:[%s8 + $0x8] sm:$0xff]
    %v1472 = vld [vmem:[%s8 + $0x10] sm:$0xff]
    %v1473 = vld [vmem:[%s8 + $0x18] sm:$0xff]
    %v1474 = vld [vmem:[%s8 + $0x20] sm:$0xff]
    %v1475 = vld [vmem:[%s8 + $0x28] sm:$0xff]
    %v1476 = vld [vmem:[%s8 + $0x30] sm:$0xff]
    %v1477 = vld [vmem:[%s8 + $0x38] sm:$0xff]
    %v1478 = vld [vmem:[%s8 + $0x40] sm:$0xff]
    %v1479 = vld [vmem:[%s8 + $0x48] sm:$0xff]
    %v1480 = vld [vmem:[%s8 + $0x50] sm:$0xff]
    %v1481 = vld [vmem:[%s8 + $0x58] sm:$0xff]
    %v1482 = vld [vmem:[%s8 + $0x60] sm:$0xff]
    %v1483 = vld [vmem:[%s8 + $0x68] sm:$0xff]
    %v1484 = vld [vmem:[%s8 + $0x70] sm:$0xff]
    %v1485 = vld [vmem:[%s8 + $0x78] sm:$0xff]
    %v1486 = vld [vmem:[%s8 + $0x80] sm:$0xff]
    %v1487 = vld [vmem:[%s8 + $0x88] sm:$0xff]
    %v1488 = vld [vmem:[%s8 + $0x90] sm:$0xff]
    %v1489 = vld [vmem:[%s8 + $0x98] sm:$0xff]
    %v1490 = vld [vmem:[%s8 + $0xa0] sm:$0xff]
    %v1491 = vld [vmem:[%s8 + $0xa8] sm:$0xff]
    %v1492 = vld [vmem:[%s8 + $0xb0] sm:$0xff]
    %v1493 = vld [vmem:[%s8 + $0xb8] sm:$0xff]
    %v1494 = vld [vmem:[%s8 + $0xc0] sm:$0xff]
    %v1495 = vld [vmem:[%s8 + $0xc8] sm:$0xff]
    %v1496 = vld [vmem:[%s8 + $0xd0] sm:$0xff]
    %v1497 = vld [vmem:[%s8 + $0xd8] sm:$0xff]
    %v1498 = vld [vmem:[%s8 + $0xe0] sm:$0xff]
    %v1499 = vld [vmem:[%s8 + $0xe8] sm:$0xff]
    %v1500 = vld [vmem:[%s8 + $0xf0] sm:$0xff]
    %v1501 = vld [vmem:[%s8 + $0xf8] sm:$0xff]
    %v1502 = vmul.f32 %v1454, %v1469
    %1503 = vadd.xlane.f32.xlu0 %v1502
    %v1504 = vpop.xlane.xlu0 %1503
    %v1505 = vmul.f32 %v1456, %v1469
    %1506 = vadd.xlane.f32.xlu0 %v1505
    %v1507 = vpop.xlane.xlu0 %1506
    %v1508 = vmul.f32 %v1454, 20.0
    %v1509 = vmul.f32 %v1456, 20.0
    %1510 = vmatprep.subr.mxu0 %v1471
    %1511 = vmatpush1.msra.mxu0 %v1470
    %1512 = vmatprep.subr.mxu0 %v1473
    %1513 = vmatpush1.msra.mxu0 %v1472
    %1514 = vmatprep.subr.mxu0 %v1475
    %1515 = vmatpush1.msra.mxu0 %v1474
    %1516 = vmatprep.subr.mxu0 %v1477
    %1517 = vmatpush1.msra.mxu0 %v1476
    %1518 = vmatprep.subr.mxu0 %v1479
    %1519 = vmatpush1.msra.mxu0 %v1478
    %1520 = vmatprep.subr.mxu0 %v1481
    %1521 = vmatpush1.msra.mxu0 %v1480
    %1522 = vmatprep.subr.mxu0 %v1483
    %1523 = vmatpush1.msra.mxu0 %v1482
    %1524 = vmatprep.subr.mxu0 %v1485
    %1525 = vmatpush1.msra.mxu0 %v1484
    %1526 = vmatprep.subr.mxu0 %v1487
    %1527 = vmatpush1.msra.mxu0 %v1486
    %1528 = vmatprep.subr.mxu0 %v1489
    %1529 = vmatpush1.msra.mxu0 %v1488
    %1530 = vmatprep.subr.mxu0 %v1491
    %1531 = vmatpush1.msra.mxu0 %v1490
    %1532 = vmatprep.subr.mxu0 %v1493
    %1533 = vmatpush1.msra.mxu0 %v1492
    %1534 = vmatprep.subr.mxu0 %v1495
    %1535 = vmatpush1.msra.mxu0 %v1494
    %1536 = vmatprep.subr.mxu0 %v1497
    %1537 = vmatpush1.msra.mxu0 %v1496
    %1538 = vmatprep.subr.mxu0 %v1499
    %1539 = vmatpush1.msra.mxu0 %v1498
    %1540 = vmatprep.subr.mxu0 %v1501
    %1541 = vmatpush1.msra.mxu0 %v1500
    %1542 = vmatprep.subr.mxu0 0.0
    %1543 = vmatpush1.msra.mxu0 0.0
    %1544 = vmatprep.subr.mxu0 0.0
    %1545 = vmatpush1.msra.mxu0 0.0
    %1546 = vmatprep.subr.mxu0 0.0
    %1547 = vmatpush1.msra.mxu0 0.0
    %1548 = vmatprep.subr.mxu0 0.0
    %1549 = vmatpush1.msra.mxu0 0.0
    %1550 = vmatprep.subr.mxu0 0.0
    %1551 = vmatpush1.msra.mxu0 0.0
    %1552 = vmatprep.subr.mxu0 0.0
    %1553 = vmatpush1.msra.mxu0 0.0
    %1554 = vmatprep.subr.mxu0 0.0
    %1555 = vmatpush1.msra.mxu0 0.0
    %1556 = vmatprep.subr.mxu0 0.0
    %1557 = vmatpush1.msra.mxu0 0.0
    %1558 = vmatprep.subr.mxu0 0.0
    %1559 = vmatpush1.msra.mxu0 0.0
    %1560 = vmatprep.subr.mxu0 0.0
    %1561 = vmatpush1.msra.mxu0 0.0
    %1562 = vmatprep.subr.mxu0 0.0
    %1563 = vmatpush1.msra.mxu0 0.0
    %1564 = vmatprep.subr.mxu0 0.0
    %1565 = vmatpush1.msra.mxu0 0.0
    %1566 = vmatprep.subr.mxu0 0.0
    %1567 = vmatpush1.msra.mxu0 0.0
    %1568 = vmatprep.subr.mxu0 0.0
    %1569 = vmatpush1.msra.mxu0 0.0
    %1570 = vmatprep.subr.mxu0 0.0
    %1571 = vmatpush1.msra.mxu0 0.0
    %1572 = vmatprep.subr.mxu0 0.0
    %1573 = vmatpush1.msra.mxu0 0.0
    %1574 = vmatprep.mubr.f32.mxu0 0.0
    %1575 = vmatmul.mubr.f32.gmra.mrb[0].mxu0 %v1508
    %v1576 = vpop.f32.mrb[0].mxu0
    %v1577 = vadd.f32 0.0, %v1576
    %v1578 = vpop.f32.mrb[0].mxu0
    %v1579 = vadd.f32 0.0, %v1578
    %1580 = vmatprep.mubr.f32.mxu0 0.0
    %1581 = vmatmul.mubr.f32.gmra.mrb[0].mxu0 %v1509
    %v1582 = vpop.f32.mrb[0].mxu0
    %v1583 = vadd.f32 0.0, %v1582
    %v1584 = vpop.f32.mrb[0].mxu0
    %v1585 = vadd.f32 0.0, %v1584
    %1586 = vdwg.mxu0
    %v1587 = vmul.f32 %v1504, 20.0
    %v1588 = vmax.f32 %v1577, %v1579
    %1589 = vmax.xlane.f32.xlu0 %v1588
    %v1590 = vpop.xlane.xlu0 %1589
    %v1591 = vmax.f32 %v1587, %v1590
    %v1592 = vsub.f32 %v1587, %v1591
    %v1593 = vmul.f32 %v1592, 1.442695
    %v1594 = vpow.pop %v1593
    %v1595 = vsub.f32 %v1577, %v1591
    %v1596 = vsub.f32 %v1579, %v1591
    %v1597 = vmul.f32 %v1595, 1.442695
    %v1598 = vpow.pop %v1597
    %v1599 = vmul.f32 %v1596, 1.442695
    %v1600 = vpow.pop %v1599
    %v1601 = vadd.f32 %v1598, %v1600
    %1602 = vadd.xlane.f32.xlu0 %v1601
    %v1603 = vpop.xlane.xlu0 %1602
    %v1604 = vadd.f32 %v1594, %v1603
    %v1605 = vlog2.pop %v1604
    %v1606 = vmul.f32 %v1605, 0.6931472
    %v1607 = vadd.f32 %v1606, %v1591
    %v1608 = vsub.f32 %v1587, %v1607
    %v1609 = vsub.f32 %v1577, %v1607
    %v1610 = vsub.f32 %v1579, %v1607
    %v1611 = vadd.f32 %v1609, %v1610
    %1612 = vadd.xlane.f32.xlu0 %v1611
    %v1613 = vpop.xlane.xlu0 %1612
    %v1614 = vadd.f32 %v1608, %v1613
    %v1615 = vmul.f32 %v1608, 0.9
    %v1616 = vmul.f32 %v1614, 0.00038910506
    %v1617 = vadd.f32 %v1615, %v1616
    %v1618 = vsub.f32 0.0, %v1617
    %vm1619 = vcmask 7168
    %v1620 = vsel %vm1619, %v1618, 0.0
    %1621 = vadd.xlane.f32.xlu0 %v1620
    %v1622 = vpop.xlane.xlu0 %1621
    %v1623 = vrot.slane %v1622, 4
    %v1624 = vadd.f32 %v1622, %v1623
    %v1625 = vrot.slane %v1624, 2
    %v1626 = vadd.f32 %v1624, %v1625
    %v1627 = vrot.slane %v1626, 1
    %v1628 = vadd.f32 %v1626, %v1627
    %s1629 = vtos %v1628
    %v1630 = vrcp.pop 8.0
    %s1631 = vtos %v1630
    %s1632 = smul.f32 %s1629, %s1631
    %vm1633 = vcmp.ge.f32.partialorder %v1587, %v1590
    %v1634 = vmul.f32 %v1507, 20.0
    %v1635 = vmax.f32 %v1583, %v1585
    %1636 = vmax.xlane.f32.xlu0 %v1635
    %v1637 = vpop.xlane.xlu0 %1636
    %v1638 = vmax.f32 %v1634, %v1637
    %v1639 = vsub.f32 %v1634, %v1638
    %v1640 = vmul.f32 %v1639, 1.442695
    %v1641 = vpow.pop %v1640
    %v1642 = vsub.f32 %v1583, %v1638
    %v1643 = vsub.f32 %v1585, %v1638
    %v1644 = vmul.f32 %v1642, 1.442695
    %v1645 = vpow.pop %v1644
    %v1646 = vmul.f32 %v1643, 1.442695
    %v1647 = vpow.pop %v1646
    %v1648 = vadd.f32 %v1645, %v1647
    %1649 = vadd.xlane.f32.xlu0 %v1648
    %v1650 = vpop.xlane.xlu0 %1649
    %v1651 = vadd.f32 %v1641, %v1650
    %v1652 = vlog2.pop %v1651
    %v1653 = vmul.f32 %v1652, 0.6931472
    %v1654 = vadd.f32 %v1653, %v1638
    %v1655 = vsub.f32 %v1634, %v1654
    %v1656 = vsub.f32 %v1583, %v1654
    %v1657 = vsub.f32 %v1585, %v1654
    %v1658 = vadd.f32 %v1656, %v1657
    %1659 = vadd.xlane.f32.xlu0 %v1658
    %v1660 = vpop.xlane.xlu0 %1659
    %v1661 = vadd.f32 %v1655, %v1660
    %v1662 = vmul.f32 %v1655, 0.9
    %v1663 = vmul.f32 %v1661, 0.00038910506
    %v1664 = vadd.f32 %v1662, %v1663
    %v1665 = vsub.f32 0.0, %v1664
    %v1666 = vsel %vm1619, %v1665, 0.0
    %1667 = vadd.xlane.f32.xlu0 %v1666
    %v1668 = vpop.xlane.xlu0 %1667
    %v1669 = vrot.slane %v1668, 4
    %v1670 = vadd.f32 %v1668, %v1669
    %v1671 = vrot.slane %v1670, 2
    %v1672 = vadd.f32 %v1670, %v1671
    %v1673 = vrot.slane %v1672, 1
    %v1674 = vadd.f32 %v1672, %v1673
    %s1675 = vtos %v1674
    %v1676 = vrcp.pop 8.0
    %s1677 = vtos %v1676
    %s1678 = smul.f32 %s1675, %s1677
    %vm1679 = vcmp.ge.f32.partialorder %v1634, %v1637
    %vm1680 = vmand %vm1633, %vm1679
    %v1681 = vsel %vm1680, 1, 0
    %v1682 = vcvt.s32.f32 %v1681
    %v1683 = vsel %vm1619, %v1682, 0.0
    %1684 = vadd.xlane.f32.xlu0 %v1683
    %v1685 = vpop.xlane.xlu0 %1684
    %v1686 = vrot.slane %v1685, 4
    %v1687 = vadd.f32 %v1685, %v1686
    %v1688 = vrot.slane %v1687, 2
    %v1689 = vadd.f32 %v1687, %v1688
    %v1690 = vrot.slane %v1689, 1
    %v1691 = vadd.f32 %v1689, %v1690
    %s1692 = vtos %v1691
    %v1693 = vsub.f32 %v1504, %v1507
    %v1694 = vsub.f32 2.0, %v1693
    %v1695 = vmax.f32 %v1694, 0.0
    %v1696 = vsel %vm1619, %v1695, 0.0
    %1697 = vadd.xlane.f32.xlu0 %v1696
    %v1698 = vpop.xlane.xlu0 %1697
    %v1699 = vrot.slane %v1698, 4
    %v1700 = vadd.f32 %v1698, %v1699
    %v1701 = vrot.slane %v1700, 2
    %v1702 = vadd.f32 %v1700, %v1701
    %v1703 = vrot.slane %v1702, 1
    %v1704 = vadd.f32 %v1702, %v1703
    %s1705 = vtos %v1704
    %v1706 = vrcp.pop 8.0
    %s1707 = vtos %v1706
    %s1708 = smul.f32 %s1705, %s1707
    %v1709 = vmul.f32 %v1695, %v1682
    %v1710 = vsel %vm1619, %v1709, 0.0
    %1711 = vadd.xlane.f32.xlu0 %v1710
    %v1712 = vpop.xlane.xlu0 %1711
    %v1713 = vrot.slane %v1712, 4
    %v1714 = vadd.f32 %v1712, %v1713
    %v1715 = vrot.slane %v1714, 2
    %v1716 = vadd.f32 %v1714, %v1715
    %v1717 = vrot.slane %v1716, 1
    %v1718 = vadd.f32 %v1716, %v1717
    %s1719 = vtos %v1718
    %s1720 = smax.f32 %s1692, 1.0
    %v1721 = vstv %s1720
    %v1722 = vrcp.pop %v1721
    %s1723 = vtos %v1722
    %s1724 = smul.f32 %s1719, %s1723
    %p1725 = scmp.gt.f32.partialorder %s1692, 0.0
    %s1726 = scalar_select %p1725, %s1724, %s1708
    %s1727 = smul.f32 %s1632, 0.8
    %s1728 = smul.f32 %s1678, 0.2
    %s1729 = sadd.f32 %s1727, %s1728
    %s1730 = sadd.f32 %s1729, %s1726
    %v1731 = vmul.f32 %v1504, 0.8
    %v1732 = vmul.f32 %v1507, 0.2
    %v1733 = vadd.f32 %v1731, %v1732
    %v1734 = vmul.f32 %v1733, 20.0
    %v1735 = vmul.f32 %v1577, 0.8
    %v1736 = vmul.f32 %v1579, 0.8
    %v1737 = vmul.f32 %v1583, 0.2
    %v1738 = vmul.f32 %v1585, 0.2
    %v1739 = vadd.f32 %v1735, %v1737
    %v1740 = vadd.f32 %v1736, %v1738
    %v1741 = vmax.f32 %v1739, %v1740
    %1742 = vmax.xlane.f32.xlu0 %v1741
    %v1743 = vpop.xlane.xlu0 %1742
    %vm1744 = vcmp.ge.f32.partialorder %v1734, %v1743
    %v1745 = vsel %vm1744, 1, 0
    %v1746 = vcvt.s32.f32 %v1745
    %v1747 = vsel %vm1619, %v1746, 0.0
    %1748 = vadd.xlane.f32.xlu0 %v1747
    %v1749 = vpop.xlane.xlu0 %1748
    %v1750 = vrot.slane %v1749, 4
    %v1751 = vadd.f32 %v1749, %v1750
    %v1752 = vrot.slane %v1751, 2
    %v1753 = vadd.f32 %v1751, %v1752
    %v1754 = vrot.slane %v1753, 1
    %v1755 = vadd.f32 %v1753, %v1754
    %s1756 = vtos %v1755
    %v1757 = vrcp.pop 8.0
    %s1758 = vtos %v1757
    %s1759 = smul.f32 %s1756, %s1758
    %s1760 = smul.f32 %s1759, 100.0
    %s1761 = scalar_lea.smem [#allocation3], 0
    %1762 = sst [smem:[%s1761]] %s1632
    %s1763 = scalar_lea.smem [#allocation3], 1
    %1764 = sst [smem:[%s1763]] %s1678
    %s1765 = scalar_lea.smem [#allocation3], 2
    %1766 = sst [smem:[%s1765]] %s1726
    %s1767 = scalar_lea.smem [#allocation3], 3
    %1768 = sst [smem:[%s1767]] %s1730
    %s1769 = scalar_lea.smem [#allocation3], 4
    %1770 = sst [smem:[%s1769]] %s1760
    %v1771 = vrot.slane %v1454, 4
    %v1772 = vadd.f32 %v1454, %v1771
    %v1773 = vrot.slane %v1772, 2
    %v1774 = vadd.f32 %v1772, %v1773
    %v1775 = vrot.slane %v1774, 1
    %v1776 = vadd.f32 %v1774, %v1775
    %v1777 = vrcp.pop 8.0
    %v1778 = vmul.f32 %v1776, %v1777
    %v1779 = vsub.f32 %v1454, %v1778
    %v1780 = vmul.f32 %v1779, %v1779
    %v1781 = vrot.slane %v1780, 4
    %v1782 = vadd.f32 %v1780, %v1781
    %v1783 = vrot.slane %v1782, 2
    %v1784 = vadd.f32 %v1782, %v1783
    %v1785 = vrot.slane %v1784, 1
    %v1786 = vadd.f32 %v1784, %v1785
    %v1787 = vrcp.pop 7.0
    %v1788 = vmul.f32 %v1786, %v1787
    %v1789 = vrsqrt.pop %v1788
    %v1790 = vmul.f32 %v1788, %v1789
    %vm1791 = vcmp.eq.f32.partialorder %v1788, inf
    %v1792 = vsel %vm1791, %v1788, %v1790
    %vm1793 = vcmp.eq.f32.partialorder %v1788, 0.0
    %v1794 = vand.u32 %v1788, 2147483648
    %v1795 = vsel %vm1793, %v1794, %v1792
    %vm1796 = vcmask 1040384
    %v1797 = vsel %vm1796, %v1795, 0.0
    %1798 = vadd.xlane.f32.xlu0 %v1797
    %v1799 = vpop.xlane.xlu0 %1798
    %v1800 = vrot.slane %v1799, 4
    %v1801 = vadd.f32 %v1799, %v1800
    %v1802 = vrot.slane %v1801, 2
    %v1803 = vadd.f32 %v1801, %v1802
    %v1804 = vrot.slane %v1803, 1
    %v1805 = vadd.f32 %v1803, %v1804
    %s1806 = vtos %v1805
    %v1807 = vrcp.pop 128.0
    %s1808 = vtos %v1807
    %s1809 = smul.f32 %s1806, %s1808
    %s1810 = scalar_lea.smem [#allocation3], 5
    %1811 = sst [smem:[%s1810]] %s1809
    %v1812 = vrot.slane %v1469, 4
    %v1813 = vadd.f32 %v1469, %v1812
    %v1814 = vrot.slane %v1813, 2
    %v1815 = vadd.f32 %v1813, %v1814
    %v1816 = vrot.slane %v1815, 1
    %v1817 = vadd.f32 %v1815, %v1816
    %v1818 = vmul.f32 %v1817, %v1777
    %v1819 = vsub.f32 %v1469, %v1818
    %v1820 = vmul.f32 %v1819, %v1819
    %v1821 = vrot.slane %v1820, 4
    %v1822 = vadd.f32 %v1820, %v1821
    %v1823 = vrot.slane %v1822, 2
    %v1824 = vadd.f32 %v1822, %v1823
    %v1825 = vrot.slane %v1824, 1
    %v1826 = vadd.f32 %v1824, %v1825
    %v1827 = vmul.f32 %v1826, %v1787
    %v1828 = vrsqrt.pop %v1827
    %v1829 = vmul.f32 %v1827, %v1828
    %vm1830 = vcmp.eq.f32.partialorder %v1827, inf
    %v1831 = vsel %vm1830, %v1827, %v1829
    %vm1832 = vcmp.eq.f32.partialorder %v1827, 0.0
    %v1833 = vand.u32 %v1827, 2147483648
    %v1834 = vsel %vm1832, %v1833, %v1831
    %v1835 = vsel %vm1796, %v1834, 0.0
    %1836 = vadd.xlane.f32.xlu0 %v1835
    %v1837 = vpop.xlane.xlu0 %1836
    %v1838 = vrot.slane %v1837, 4
    %v1839 = vadd.f32 %v1837, %v1838
    %v1840 = vrot.slane %v1839, 2
    %v1841 = vadd.f32 %v1839, %v1840
    %v1842 = vrot.slane %v1841, 1
    %v1843 = vadd.f32 %v1841, %v1842
    %s1844 = vtos %v1843
    %v1845 = vrcp.pop 128.0
    %s1846 = vtos %v1845
    %s1847 = smul.f32 %s1844, %s1846
    %s1848 = scalar_lea.smem [#allocation3], 6
    %1849 = sst [smem:[%s1848]] %s1847
    %v1850 = vrot.slane %v1456, 4
    %v1851 = vadd.f32 %v1456, %v1850
    %v1852 = vrot.slane %v1851, 2
    %v1853 = vadd.f32 %v1851, %v1852
    %v1854 = vrot.slane %v1853, 1
    %v1855 = vadd.f32 %v1853, %v1854
    %v1856 = vmul.f32 %v1855, %v1777
    %v1857 = vsub.f32 %v1456, %v1856
    %v1858 = vmul.f32 %v1857, %v1857
    %v1859 = vrot.slane %v1858, 4
    %v1860 = vadd.f32 %v1858, %v1859
    %v1861 = vrot.slane %v1860, 2
    %v1862 = vadd.f32 %v1860, %v1861
    %v1863 = vrot.slane %v1862, 1
    %v1864 = vadd.f32 %v1862, %v1863
    %v1865 = vmul.f32 %v1864, %v1787
    %v1866 = vrsqrt.pop %v1865
    %v1867 = vmul.f32 %v1865, %v1866
    %vm1868 = vcmp.eq.f32.partialorder %v1865, inf
    %v1869 = vsel %vm1868, %v1865, %v1867
    %vm1870 = vcmp.eq.f32.partialorder %v1865, 0.0
    %v1871 = vand.u32 %v1865, 2147483648
    %v1872 = vsel %vm1870, %v1871, %v1869
    %v1873 = vsel %vm1796, %v1872, 0.0
    %1874 = vadd.xlane.f32.xlu0 %v1873
    %v1875 = vpop.xlane.xlu0 %1874
    %v1876 = vrot.slane %v1875, 4
    %v1877 = vadd.f32 %v1875, %v1876
    %v1878 = vrot.slane %v1877, 2
    %v1879 = vadd.f32 %v1877, %v1878
    %v1880 = vrot.slane %v1879, 1
    %v1881 = vadd.f32 %v1879, %v1880
    %s1882 = vtos %v1881
    %v1883 = vrcp.pop 128.0
    %s1884 = vtos %v1883
    %s1885 = smul.f32 %s1882, %s1884
    %s1886 = scalar_lea.smem [#allocation3], 7
    %1887 = sst [smem:[%s1886]] %s1885
    %s1888 = sld [smem:[#allocation2]]
    %v1889 = vadd.s32 %v329, 128
    %v1890 = vstv %s1888
    %v1891 = vadd.s32 %v1890, %v136
    %vm1892 = vcmp.eq.s32.totalorder %v329, %v1891
    %vm1893 = vcmp.eq.s32.totalorder %v1889, %v1891
    %v1894 = vsel %vm1892, 1, 0
    %v1895 = vsel %vm1893, 1, 0
    %v1896 = vcvt.s32.f32 %v1894
    %v1897 = vcvt.s32.f32 %v1895
    %v1898 = vrot.slane %v1896, 4
    %v1899 = vmax.f32 %v1896, %v1898
    %v1900 = vrot.slane %v1899, 2
    %v1901 = vmax.f32 %v1899, %v1900
    %v1902 = vrot.slane %v1901, 1
    %v1903 = vmax.f32 %v1901, %v1902
    %v1904 = vrot.slane %v1897, 4
    %v1905 = vmax.f32 %v1897, %v1904
    %v1906 = vrot.slane %v1905, 2
    %v1907 = vmax.f32 %v1905, %v1906
    %v1908 = vrot.slane %v1907, 1
    %v1909 = vmax.f32 %v1907, %v1908
    %v1910 = vsub.f32 1.0, %v1903
    %v1911 = vsub.f32 1.0, %v1909
    %1912 = vxpose.xlu0.b32.start [1/16] %v1469, 128
    %1913 = vxpose.xlu0.b32.cont [2/16] 0.0, 128
    %1914 = vxpose.xlu0.b32.cont [3/16] 0.0, 128
    %1915 = vxpose.xlu0.b32.cont [4/16] 0.0, 128
    %1916 = vxpose.xlu0.b32.cont [5/16] 0.0, 128
    %1917 = vxpose.xlu0.b32.cont [6/16] 0.0, 128
    %1918 = vxpose.xlu0.b32.cont [7/16] 0.0, 128
    %1919 = vxpose.xlu0.b32.cont [8/16] 0.0, 128
    %1920 = vxpose.xlu0.b32.cont [9/16] 0.0, 128
    %1921 = vxpose.xlu0.b32.cont [10/16] 0.0, 128
    %1922 = vxpose.xlu0.b32.cont [11/16] 0.0, 128
    %1923 = vxpose.xlu0.b32.cont [12/16] 0.0, 128
    %1924 = vxpose.xlu0.b32.cont [13/16] 0.0, 128
    %1925 = vxpose.xlu0.b32.cont [14/16] 0.0, 128
    %1926 = vxpose.xlu0.b32.cont [15/16] 0.0, 128
    %1927 = vxpose.xlu0.b32.end [16/16] 0.0, 128
    %v1928 = vpop.trf.xlu0
    %v1929 = vpop.trf.xlu0
    %v1930 = vpop.trf.xlu0
    %v1931 = vpop.trf.xlu0
    %v1932 = vpop.trf.xlu0
    %v1933 = vpop.trf.xlu0
    %v1934 = vpop.trf.xlu0
    %v1935 = vpop.trf.xlu0
    %v1936 = vpop.trf.xlu0
    %v1937 = vpop.trf.xlu0
    %v1938 = vpop.trf.xlu0
    %v1939 = vpop.trf.xlu0
    %v1940 = vpop.trf.xlu0
    %v1941 = vpop.trf.xlu0
    %v1942 = vpop.trf.xlu0
    %v1943 = vpop.trf.xlu0
    %vm1944 = vcmask 64512
    %v1946 = vsel %vm1944, %v1928, 0
    %v1949 = vsel %vm1944, %v1929, 0
    %v1952 = vsel %vm1944, %v1930, 0
    %v1955 = vsel %vm1944, %v1931, 0
    %v1958 = vsel %vm1944, %v1932, 0
    %v1961 = vsel %vm1944, %v1933, 0
    %v1964 = vsel %vm1944, %v1934, 0
    %v1967 = vsel %vm1944, %v1935, 0
    %v1970 = vsel %vm1944, %v1936, 0
    %v1973 = vsel %vm1944, %v1937, 0
    %v1976 = vsel %vm1944, %v1938, 0
    %v1979 = vsel %vm1944, %v1939, 0
    %v1982 = vsel %vm1944, %v1940, 0
    %v1985 = vsel %vm1944, %v1941, 0
    %v1988 = vsel %vm1944, %v1942, 0
    %v1991 = vsel %vm1944, %v1943, 0
    %1993 = vmatprep.subr.mxu0 %v1897
    %1994 = vmatpush1.msra.mxu0 %v1896
    %1995 = vmatprep.subr.mxu0 0.0
    %1996 = vmatpush1.msra.mxu0 0.0
    %1997 = vmatprep.subr.mxu0 0.0
    %1998 = vmatpush1.msra.mxu0 0.0
    %1999 = vmatprep.subr.mxu0 0.0
    %2000 = vmatpush1.msra.mxu0 0.0
    %2001 = vmatprep.subr.mxu0 0.0
    %2002 = vmatpush1.msra.mxu0 0.0
    %2003 = vmatprep.subr.mxu0 0.0
    %2004 = vmatpush1.msra.mxu0 0.0
    %2005 = vmatprep.subr.mxu0 0.0
    %2006 = vmatpush1.msra.mxu0 0.0
    %2007 = vmatprep.subr.mxu0 0.0
    %2008 = vmatpush1.msra.mxu0 0.0
    %2009 = vmatprep.subr.mxu0 0.0
    %2010 = vmatpush1.msra.mxu0 0.0
    %2011 = vmatprep.subr.mxu0 0.0
    %2012 = vmatpush1.msra.mxu0 0.0
    %2013 = vmatprep.subr.mxu0 0.0
    %2014 = vmatpush1.msra.mxu0 0.0
    %2015 = vmatprep.subr.mxu0 0.0
    %2016 = vmatpush1.msra.mxu0 0.0
    %2017 = vmatprep.subr.mxu0 0.0
    %2018 = vmatpush1.msra.mxu0 0.0
    %2019 = vmatprep.subr.mxu0 0.0
    %2020 = vmatpush1.msra.mxu0 0.0
    %2021 = vmatprep.subr.mxu0 0.0
    %2022 = vmatpush1.msra.mxu0 0.0
    %2023 = vmatprep.subr.mxu0 0.0
    %2024 = vmatpush1.msra.mxu0 0.0
    %2025 = vmatprep.subr.mxu0 0.0
    %2026 = vmatpush1.msra.mxu0 0.0
    %2027 = vmatprep.subr.mxu0 0.0
    %2028 = vmatpush1.msra.mxu0 0.0
    %2029 = vmatprep.subr.mxu0 0.0
    %2030 = vmatpush1.msra.mxu0 0.0
    %2031 = vmatprep.subr.mxu0 0.0
    %2032 = vmatpush1.msra.mxu0 0.0
    %2033 = vmatprep.subr.mxu0 0.0
    %2034 = vmatpush1.msra.mxu0 0.0
    %2035 = vmatprep.subr.mxu0 0.0
    %2036 = vmatpush1.msra.mxu0 0.0
    %2037 = vmatprep.subr.mxu0 0.0
    %2038 = vmatpush1.msra.mxu0 0.0
    %2039 = vmatprep.subr.mxu0 0.0
    %2040 = vmatpush1.msra.mxu0 0.0
    %2041 = vmatprep.subr.mxu0 0.0
    %2042 = vmatpush1.msra.mxu0 0.0
    %2043 = vmatprep.subr.mxu0 0.0
    %2044 = vmatpush1.msra.mxu0 0.0
    %2045 = vmatprep.subr.mxu0 0.0
    %2046 = vmatpush1.msra.mxu0 0.0
    %2047 = vmatprep.subr.mxu0 0.0
    %2048 = vmatpush1.msra.mxu0 0.0
    %2049 = vmatprep.subr.mxu0 0.0
    %2050 = vmatpush1.msra.mxu0 0.0
    %2051 = vmatprep.subr.mxu0 0.0
    %2052 = vmatpush1.msra.mxu0 0.0
    %2053 = vmatprep.subr.mxu0 0.0
    %2054 = vmatpush1.msra.mxu0 0.0
    %2055 = vmatprep.subr.mxu0 0.0
    %2056 = vmatpush1.msra.mxu0 0.0
    %2057 = vmatprep.mubr.f32.mxu0 0.0
    %2058 = vmatmul.mubr.f32.gmra.mrb[0].mxu0 %v1946
    %v2059 = vpop.f32.mrb[0].mxu0
    %v2060 = vadd.f32 0.0, %v2059
    %v2061 = vpop.f32.mrb[0].mxu0
    %v2062 = vadd.f32 0.0, %v2061
    %2063 = vmatprep.mubr.f32.mxu0 0.0
    %2064 = vmatmul.mubr.f32.gmra.mrb[0].mxu0 %v1949
    %v2065 = vpop.f32.mrb[0].mxu0
    %v2066 = vadd.f32 0.0, %v2065
    %v2067 = vpop.f32.mrb[0].mxu0
    %v2068 = vadd.f32 0.0, %v2067
    %2069 = vmatprep.mubr.f32.mxu0 0.0
    %2070 = vmatmul.mubr.f32.gmra.mrb[0].mxu0 %v1952
    %v2071 = vpop.f32.mrb[0].mxu0
    %v2072 = vadd.f32 0.0, %v2071
    %v2073 = vpop.f32.mrb[0].mxu0
    %v2074 = vadd.f32 0.0, %v2073
    %2075 = vmatprep.mubr.f32.mxu0 0.0
    %2076 = vmatmul.mubr.f32.gmra.mrb[0].mxu0 %v1955
    %v2077 = vpop.f32.mrb[0].mxu0
    %v2078 = vadd.f32 0.0, %v2077
    %v2079 = vpop.f32.mrb[0].mxu0
    %v2080 = vadd.f32 0.0, %v2079
    %2081 = vmatprep.mubr.f32.mxu0 0.0
    %2082 = vmatmul.mubr.f32.gmra.mrb[0].mxu0 %v1958
    %v2083 = vpop.f32.mrb[0].mxu0
    %v2084 = vadd.f32 0.0, %v2083
    %v2085 = vpop.f32.mrb[0].mxu0
    %v2086 = vadd.f32 0.0, %v2085
    %2087 = vmatprep.mubr.f32.mxu0 0.0
    %2088 = vmatmul.mubr.f32.gmra.mrb[0].mxu0 %v1961
    %v2089 = vpop.f32.mrb[0].mxu0
    %v2090 = vadd.f32 0.0, %v2089
    %v2091 = vpop.f32.mrb[0].mxu0
    %v2092 = vadd.f32 0.0, %v2091
    %2093 = vmatprep.mubr.f32.mxu0 0.0
    %2094 = vmatmul.mubr.f32.gmra.mrb[0].mxu0 %v1964
    %v2095 = vpop.f32.mrb[0].mxu0
    %v2096 = vadd.f32 0.0, %v2095
    %v2097 = vpop.f32.mrb[0].mxu0
    %v2098 = vadd.f32 0.0, %v2097
    %2099 = vmatprep.mubr.f32.mxu0 0.0
    %2100 = vmatmul.mubr.f32.gmra.mrb[0].mxu0 %v1967
    %v2101 = vpop.f32.mrb[0].mxu0
    %v2102 = vadd.f32 0.0, %v2101
    %v2103 = vpop.f32.mrb[0].mxu0
    %v2104 = vadd.f32 0.0, %v2103
    %2105 = vmatprep.mubr.f32.mxu0 0.0
    %2106 = vmatmul.mubr.f32.gmra.mrb[0].mxu0 %v1970
    %v2107 = vpop.f32.mrb[0].mxu0
    %v2108 = vadd.f32 0.0, %v2107
    %v2109 = vpop.f32.mrb[0].mxu0
    %v2110 = vadd.f32 0.0, %v2109
    %2111 = vmatprep.mubr.f32.mxu0 0.0
    %2112 = vmatmul.mubr.f32.gmra.mrb[0].mxu0 %v1973
    %v2113 = vpop.f32.mrb[0].mxu0
    %v2114 = vadd.f32 0.0, %v2113
    %v2115 = vpop.f32.mrb[0].mxu0
    %v2116 = vadd.f32 0.0, %v2115
    %2117 = vmatprep.mubr.f32.mxu0 0.0
    %2118 = vmatmul.mubr.f32.gmra.mrb[0].mxu0 %v1976
    %v2119 = vpop.f32.mrb[0].mxu0
    %v2120 = vadd.f32 0.0, %v2119
    %v2121 = vpop.f32.mrb[0].mxu0
    %v2122 = vadd.f32 0.0, %v2121
    %2123 = vmatprep.mubr.f32.mxu0 0.0
    %2124 = vmatmul.mubr.f32.gmra.mrb[0].mxu0 %v1979
    %v2125 = vpop.f32.mrb[0].mxu0
    %v2126 = vadd.f32 0.0, %v2125
    %v2127 = vpop.f32.mrb[0].mxu0
    %v2128 = vadd.f32 0.0, %v2127
    %2129 = vmatprep.mubr.f32.mxu0 0.0
    %2130 = vmatmul.mubr.f32.gmra.mrb[0].mxu0 %v1982
    %v2131 = vpop.f32.mrb[0].mxu0
    %v2132 = vadd.f32 0.0, %v2131
    %v2133 = vpop.f32.mrb[0].mxu0
    %v2134 = vadd.f32 0.0, %v2133
    %2135 = vmatprep.mubr.f32.mxu0 0.0
    %2136 = vmatmul.mubr.f32.gmra.mrb[0].mxu0 %v1985
    %v2137 = vpop.f32.mrb[0].mxu0
    %v2138 = vadd.f32 0.0, %v2137
    %v2139 = vpop.f32.mrb[0].mxu0
    %v2140 = vadd.f32 0.0, %v2139
    %2141 = vmatprep.mubr.f32.mxu0 0.0
    %2142 = vmatmul.mubr.f32.gmra.mrb[0].mxu0 %v1988
    %v2143 = vpop.f32.mrb[0].mxu0
    %v2144 = vadd.f32 0.0, %v2143
    %v2145 = vpop.f32.mrb[0].mxu0
    %v2146 = vadd.f32 0.0, %v2145
    %2147 = vmatprep.mubr.f32.mxu0 0.0
    %2148 = vmatmul.mubr.f32.gmra.mrb[0].mxu0 %v1991
    %v2149 = vpop.f32.mrb[0].mxu0
    %v2150 = vadd.f32 0.0, %v2149
    %v2151 = vpop.f32.mrb[0].mxu0
    %v2152 = vadd.f32 0.0, %v2151
    %2153 = vdwg.mxu0
    %v2154 = vmul.f32 %v1470, %v1910
    %v2155 = vmul.f32 %v1471, %v1911
    %v2156 = vmul.f32 %v1472, %v1910
    %v2157 = vmul.f32 %v1473, %v1911
    %v2158 = vmul.f32 %v1474, %v1910
    %v2159 = vmul.f32 %v1475, %v1911
    %v2160 = vmul.f32 %v1476, %v1910
    %v2161 = vmul.f32 %v1477, %v1911
    %v2162 = vmul.f32 %v1478, %v1910
    %v2163 = vmul.f32 %v1479, %v1911
    %v2164 = vmul.f32 %v1480, %v1910
    %v2165 = vmul.f32 %v1481, %v1911
    %v2166 = vmul.f32 %v1482, %v1910
    %v2167 = vmul.f32 %v1483, %v1911
    %v2168 = vmul.f32 %v1484, %v1910
    %v2169 = vmul.f32 %v1485, %v1911
    %v2170 = vmul.f32 %v1486, %v1910
    %v2171 = vmul.f32 %v1487, %v1911
    %v2172 = vmul.f32 %v1488, %v1910
    %v2173 = vmul.f32 %v1489, %v1911
    %v2174 = vmul.f32 %v1490, %v1910
    %v2175 = vmul.f32 %v1491, %v1911
    %v2176 = vmul.f32 %v1492, %v1910
    %v2177 = vmul.f32 %v1493, %v1911
    %v2178 = vmul.f32 %v1494, %v1910
    %v2179 = vmul.f32 %v1495, %v1911
    %v2180 = vmul.f32 %v1496, %v1910
    %v2181 = vmul.f32 %v1497, %v1911
    %v2182 = vmul.f32 %v1498, %v1910
    %v2183 = vmul.f32 %v1499, %v1911
    %v2184 = vmul.f32 %v1500, %v1910
    %v2185 = vmul.f32 %v1501, %v1911
    %v2186 = vadd.f32 %v2154, %v2060
    %v2187 = vadd.f32 %v2155, %v2062
    %v2188 = vadd.f32 %v2156, %v2066
    %v2189 = vadd.f32 %v2157, %v2068
    %v2190 = vadd.f32 %v2158, %v2072
    %v2191 = vadd.f32 %v2159, %v2074
    %v2192 = vadd.f32 %v2160, %v2078
    %v2193 = vadd.f32 %v2161, %v2080
    %v2194 = vadd.f32 %v2162, %v2084
    %v2195 = vadd.f32 %v2163, %v2086
    %v2196 = vadd.f32 %v2164, %v2090
    %v2197 = vadd.f32 %v2165, %v2092
    %v2198 = vadd.f32 %v2166, %v2096
    %v2199 = vadd.f32 %v2167, %v2098
    %v2200 = vadd.f32 %v2168, %v2102
    %v2201 = vadd.f32 %v2169, %v2104
    %v2202 = vadd.f32 %v2170, %v2108
    %v2203 = vadd.f32 %v2171, %v2110
    %v2204 = vadd.f32 %v2172, %v2114
    %v2205 = vadd.f32 %v2173, %v2116
    %v2206 = vadd.f32 %v2174, %v2120
    %v2207 = vadd.f32 %v2175, %v2122
    %v2208 = vadd.f32 %v2176, %v2126
    %v2209 = vadd.f32 %v2177, %v2128
    %v2210 = vadd.f32 %v2178, %v2132
    %v2211 = vadd.f32 %v2179, %v2134
    %v2212 = vadd.f32 %v2180, %v2138
    %v2213 = vadd.f32 %v2181, %v2140
    %v2214 = vadd.f32 %v2182, %v2144
    %v2215 = vadd.f32 %v2183, %v2146
    %v2216 = vadd.f32 %v2184, %v2150
    %v2217 = vadd.f32 %v2185, %v2152
    %2218 = vst [vmem:[%s11] sm:$0xff] %v2186
    %2219 = vst [vmem:[%s11 + $0x8] sm:$0xff] %v2187
    %2220 = vst [vmem:[%s11 + $0x10] sm:$0xff] %v2188
    %2221 = vst [vmem:[%s11 + $0x18] sm:$0xff] %v2189
    %2222 = vst [vmem:[%s11 + $0x20] sm:$0xff] %v2190
    %2223 = vst [vmem:[%s11 + $0x28] sm:$0xff] %v2191
    %2224 = vst [vmem:[%s11 + $0x30] sm:$0xff] %v2192
    %2225 = vst [vmem:[%s11 + $0x38] sm:$0xff] %v2193
    %2226 = vst [vmem:[%s11 + $0x40] sm:$0xff] %v2194
    %2227 = vst [vmem:[%s11 + $0x48] sm:$0xff] %v2195
    %2228 = vst [vmem:[%s11 + $0x50] sm:$0xff] %v2196
    %2229 = vst [vmem:[%s11 + $0x58] sm:$0xff] %v2197
    %2230 = vst [vmem:[%s11 + $0x60] sm:$0xff] %v2198
    %2231 = vst [vmem:[%s11 + $0x68] sm:$0xff] %v2199
    %2232 = vst [vmem:[%s11 + $0x70] sm:$0xff] %v2200
    %2233 = vst [vmem:[%s11 + $0x78] sm:$0xff] %v2201
    %2234 = vst [vmem:[%s11 + $0x80] sm:$0xff] %v2202
    %2235 = vst [vmem:[%s11 + $0x88] sm:$0xff] %v2203
    %2236 = vst [vmem:[%s11 + $0x90] sm:$0xff] %v2204
    %2237 = vst [vmem:[%s11 + $0x98] sm:$0xff] %v2205
    %2238 = vst [vmem:[%s11 + $0xa0] sm:$0xff] %v2206
    %2239 = vst [vmem:[%s11 + $0xa8] sm:$0xff] %v2207
    %2240 = vst [vmem:[%s11 + $0xb0] sm:$0xff] %v2208
    %2241 = vst [vmem:[%s11 + $0xb8] sm:$0xff] %v2209
    %2242 = vst [vmem:[%s11 + $0xc0] sm:$0xff] %v2210
    %2243 = vst [vmem:[%s11 + $0xc8] sm:$0xff] %v2211
    %2244 = vst [vmem:[%s11 + $0xd0] sm:$0xff] %v2212
    %2245 = vst [vmem:[%s11 + $0xd8] sm:$0xff] %v2213
    %2246 = vst [vmem:[%s11 + $0xe0] sm:$0xff] %v2214
    %2247 = vst [vmem:[%s11 + $0xe8] sm:$0xff] %v2215
    %2248 = vst [vmem:[%s11 + $0xf0] sm:$0xff] %v2216
    %2249 = vst [vmem:[%s11 + $0xf8] sm:$0xff] %v2217
    // Predicated region
    $region42: #{_device_step.1} parent=1 // pred_check
      _
    $region43: #{_device_step.1} parent=1 // pred_check_branch
      %2251 = sbr.rel (0) target = $region45
    $region44: #{_device_step.1} parent=1 // pred_region
      %s2253 = ssub.s32 16, 16
      %2254 = vsyncadd [#allocation4], %s2253
      %2257 = dma.smem_to_hbm [#allocation3], 16, %s10, [#allocation4]
    $region45: #{_device_step.1} parent=1 // pred_fallthru
      _
    // Predicated region
    $region46: #{_device_step.1} parent=1 // pred_check
      _
    $region47: #{_device_step.1} parent=1 // pred_check_branch
      %2259 = sbr.rel (0) target = $region49
    $region48: #{_device_step.1} parent=1 // pred_region
      _
    $region49: #{_device_step.1} parent=1 // pred_fallthru
      _
    // Predicated region
    $region50: #{_device_step.1} parent=1 // pred_check
      _
    $region51: #{_device_step.1} parent=1 // pred_check_branch
      %2261 = sbr.rel (0) target = $region53
    $region52: #{_device_step.1} parent=1 // pred_region
      %2262 = dma.done [#allocation4], 16
    $region53: #{_device_step.1} parent=1 // pred_fallthru
      _
    // Predicated region
    $region54: #{_device_step.1} parent=1 // pred_check
      _
    $region55: #{_device_step.1} parent=1 // pred_check_branch
      %2264 = sbr.rel (0) target = $region57
    $region56: #{_device_step.1} parent=1 // pred_region
      _
    $region57: #{_device_step.1} parent=1 // pred_fallthru
      _
    %2265 = sfence
    %2266 = vsyncpa [#allocation4], 1

</llo_original>
